<compile_context>
chip_gen: v5e
topology: v5e:2x2
jax: 0.10.0
libtpu: 0.0.40
codegen_flags: <defaults>
</compile_context>

<pallas_src>
import numpy as np
import jax
import jax.numpy as jnp
from jax.experimental import pallas as pl
from jax.experimental.pallas import tpu as pltpu

# ---- fixed geometry implied by the module (MNIST-like input, fc1 in = 20*4*4) ----
IMG = 28                 # input spatial size
K = 5                    # conv kernel size
C1 = 10                  # Gabor / conv1 output channels
C2 = 20                  # conv2 output channels
OH1 = IMG - K + 1        # 24  conv1 valid output height/width
P1 = OH1 // 2            # 12  after first 2x2 pool
OH2 = P1 - K + 1         # 8   conv2 valid output height/width
P2 = OH2 // 2            # 4   after second 2x2 pool
FEAT = C2 * P2 * P2      # 320
NH = 50                  # fc1 width
NCLS = 10                # classes
H1PAD = 16               # pooled conv1 rows per image, padded 12 -> 16 (8-aligned)


# ------------------------------ Pallas kernel ----------------------------------

def _gabor_net_kernel(x_ref, w1_ref, re1_ref, ro1_ref, w2_ref, b2_ref,
                      re2_ref, ro2_ref, wf1_ref, bf1_ref, wf2_ref, bf2_ref,
                      o_ref, h1_ref):
    """Fully fused forward for a tile of T images (T = x_ref.shape[0]).

    Layouts (rows always carry the image index t as the major part):
      conv1 activations : [(t, i), (c1, j')]  = [T*24, 120]
      pooled conv1      : scratch [T, 16, 120] (rows 12..15 per image are zero pad)
      conv2 activations : [(t, i2), (c2, j2')] = [T*8, 80]
      head              : [T, 50] -> [T, 10]
    """
    T = x_ref.shape[0]

    def mm(a, b):
        return jnp.dot(a, b, preferred_element_type=jnp.float32)

    # ---- conv1 (fixed Gabor bank).  Vertical taps are folded into the band weights;
    #      the horizontal half of the 2x2 pool is folded via even/odd band sets.
    a_eo = []
    for jp in range(2):
        acc = None
        for di in range(K):
            xs = x_ref[:, pl.ds(di, OH1), :].reshape(T * OH1, IMG)   # [(t,i), k]
            part = mm(xs, w1_ref[jp, di, :, :])                      # [T*24, 120]
            acc = part if acc is None else acc + part
        a_eo.append(acc)
    aj = jnp.maximum(a_eo[0], a_eo[1])                               # col-pooled conv1

    # ---- vertical pool half via host-built 0/1 row selectors (MXU) + relu,
    #      staged into [T, 16, 120] scratch so conv2 can slice rows per tap.
    h1 = jnp.maximum(jnp.maximum(mm(re1_ref[...], aj), mm(ro1_ref[...], aj)), 0.0)
    h1_ref[...] = h1.reshape(T, H1PAD, C1 * P1)

    # ---- conv2 (+bias); same band / even-odd column-pool folding as conv1.
    b_eo = []
    for jp in range(2):
        acc = None
        for di in range(K):
            hs = h1_ref[:, pl.ds(di, OH2), :].reshape(T * OH2, C1 * P1)
            part = mm(hs, w2_ref[jp, di, :, :])                      # [T*8, 80]
            acc = part if acc is None else acc + part
        b_eo.append(acc)
    bj = jnp.maximum(b_eo[0], b_eo[1]) + b2_ref[...]                 # [T*8, 80]
    # TODO(synk): Dropout2d(0.5) treated as eval-mode identity (torch RNG has no
    # deterministic Pallas equivalent).

    # ---- vertical pool half + relu fused with the fc1 NCHW flatten: one selector
    #      pair and one [80,50] fc1 slice per pooled row u.
    z = None
    for u in range(P2):
        pu = jnp.maximum(jnp.maximum(mm(re2_ref[u, :, :], bj),
                                     mm(ro2_ref[u, :, :], bj)), 0.0)  # [T, 80]
        zu = mm(pu, wf1_ref[u, :, :])                                 # [T, 50]
        z = zu if z is None else z + zu
    z = jnp.maximum(z + bf1_ref[...], 0.0)                            # fc1 + relu

    # ---- fc2 + log_softmax
    logits = mm(z, wf2_ref[...]) + bf2_ref[...]                       # [T, 10]
    m = jnp.max(logits, axis=-1, keepdims=True)
    s = logits - m
    lse = jnp.log(jnp.sum(jnp.exp(s), axis=-1, keepdims=True))
    o_ref[0] = s - lse


# -------------------------------- wrapper --------------------------------------

def _full_spec(arr):
    zeros = (0,) * arr.ndim
    return pl.BlockSpec(arr.shape, lambda m: zeros)      # resident, DMA'd once


def network_gabor_forward(x, p):
    """x: [B, 1, 28, 28] float32 -> log-probs [B, 10]."""
    B = x.shape[0]
    T = p["re2"].shape[1]                 # images per grid step (static, from prep)
    G = -(-B // T)
    Bpad = G * T
    x3 = x.reshape(B, IMG, IMG)
    if Bpad != B:                         # pad batch to a whole number of tiles
        x3 = jnp.pad(x3, ((0, Bpad - B), (0, 0), (0, 0)))

    out = pl.pallas_call(
        _gabor_net_kernel,
        out_shape=jax.ShapeDtypeStruct((G, T, NCLS), jnp.float32),
        grid=(G,),
        in_specs=[
            pl.BlockSpec((T, IMG, IMG), lambda m: (m, 0, 0)),
            _full_spec(p["w1b"]), _full_spec(p["re1"]), _full_spec(p["ro1"]),
            _full_spec(p["w2b"]), _full_spec(p["b2row"]),
            _full_spec(p["re2"]), _full_spec(p["ro2"]),
            _full_spec(p["wf1s"]), _full_spec(p["bf1r"]),
            _full_spec(p["wf2"]), _full_spec(p["bf2r"]),
        ],
        out_specs=pl.BlockSpec((1, T, NCLS), lambda m: (m, 0, 0)),
        scratch_shapes=[pltpu.VMEM((T, H1PAD, C1 * P1), jnp.float32)],
        compiler_params=pltpu.CompilerParams(
            dimension_semantics=("parallel",)),   # v7x: shard image tiles across TCs
    )(x3, p["w1b"], p["re1"], p["ro1"], p["w2b"], p["b2row"],
      p["re2"], p["ro2"], p["wf1s"], p["bf1r"], p["wf2"], p["bf2r"])

    return out.reshape(Bpad, NCLS)[:B]


# ------------------- host-side (one-time) weight preparation -------------------

def prepare_params(params, tile=8):
    """Build banded conv weights (vertical taps + horizontal pool half folded in),
    0/1 pool row-selectors sized for `tile` images per grid step, and the fc1 weight
    split matching the torch NCHW flatten order."""
    g = np.asarray(params["gabor"], np.float32)[:, 0]        # [10, 5, 5]
    w2 = np.asarray(params["w_conv2"], np.float32)           # [20, 10, 5, 5]
    b2 = np.asarray(params["b_conv2"], np.float32)           # [20]
    wfc1 = np.asarray(params["w_fc1"], np.float32)           # [320, 50]
    bfc1 = np.asarray(params["b_fc1"], np.float32)           # [50]
    wfc2 = np.asarray(params["w_fc2"], np.float32)           # [50, 10]
    bfc2 = np.asarray(params["b_fc2"], np.float32)           # [10]

    # conv1 bands: w1b[jp, di, k, c*12+q] = g[c, di, k - (2q+jp)]  (0 <= . < 5)
    w1b = np.zeros((2, K, IMG, C1 * P1), np.float32)
    for jp in range(2):
        for di in range(K):
            for c in range(C1):
                for q in range(P1):
                    lo = 2 * q + jp
                    w1b[jp, di, lo:lo + K, c * P1 + q] = g[c, di]

    # conv2 bands: w2b[jp, di, c1*12+q, c2*4+s] = w2[c2, c1, di, q - (2s+jp)]
    w2b = np.zeros((2, K, C1 * P1, C2 * P2), np.float32)
    for jp in range(2):
        for di in range(K):
            for c2 in range(C2):
                for c1 in range(C1):
                    for s in range(P2):
                        lo = c1 * P1 + 2 * s + jp
                        w2b[jp, di, lo:lo + K, c2 * P2 + s] = w2[c2, c1, di]

    # vertical-pool row selectors for pool1: [tile*16, tile*24] (rows 12..15/img zero)
    re1 = np.zeros((tile * H1PAD, tile * OH1), np.float32)
    ro1 = np.zeros_like(re1)
    for t in range(tile):
        for p_ in range(P1):
            re1[t * H1PAD + p_, t * OH1 + 2 * p_] = 1.0
            ro1[t * H1PAD + p_, t * OH1 + 2 * p_ + 1] = 1.0

    # vertical-pool row selectors for pool2, split per pooled row u (fc1 fold)
    re2 = np.zeros((P2, tile, tile * OH2), np.float32)
    ro2 = np.zeros_like(re2)
    for u in range(P2):
        for t in range(tile):
            re2[u, t, t * OH2 + 2 * u] = 1.0
            ro2[u, t, t * OH2 + 2 * u + 1] = 1.0

    # fc1 split by pooled row u: wf1s[u, c2*4+s, h] = wfc1[c2*16 + u*4 + s, h]
    wf1s = wfc1.reshape(C2, P2, P2, NH).transpose(1, 0, 2, 3)
    wf1s = np.ascontiguousarray(wf1s).reshape(P2, C2 * P2, NH)

    return {
        "w1b": jnp.asarray(w1b), "w2b": jnp.asarray(w2b),
        "b2row": jnp.asarray(np.repeat(b2, P2)[None, :]),            # [1, 80]
        "re1": jnp.asarray(re1), "ro1": jnp.asarray(ro1),
        "re2": jnp.asarray(re2), "ro2": jnp.asarray(ro2),
        "wf1s": jnp.asarray(wf1s),
        "bf1r": jnp.asarray(bfc1[None, :]),                          # [1, 50]
        "wf2": jnp.asarray(wfc2),
        "bf2r": jnp.asarray(bfc2[None, :]),                          # [1, 10]
    }


# --------------------------- deterministic params ------------------------------

def make_gabor_kernels(n=10, ksize=5, sigma=2.0, lam=4.0, gamma=0.5, psi=0.0):
    half = ksize // 2
    ys, xs = np.mgrid[-half:half + 1, -half:half + 1].astype(np.float64)
    ks = []
    for i in range(n):
        theta = np.pi * i / n
        xr = xs * np.cos(theta) + ys * np.sin(theta)
        yr = -xs * np.sin(theta) + ys * np.cos(theta)
        g = np.exp(-(xr ** 2 + (gamma ** 2) * yr ** 2) / (2 * sigma ** 2)) \
            * np.cos(2 * np.pi * xr / lam + psi)
        ks.append(g)
    return np.stack(ks).astype(np.float32)[:, None, :, :]    # [10, 1, 5, 5]


# --------------------------- pure-JAX reference --------------------------------

def reference_forward(x, params):
    dn = ("NCHW", "OIHW", "NCHW")
    g = jax.lax.conv_general_dilated(x, params["gabor"], (1, 1), "VALID",
                                     dimension_numbers=dn)
    h = jnp.maximum(jax.lax.reduce_window(g, -jnp.inf, jax.lax.max,
                                          (1, 1, 2, 2), (1, 1, 2, 2), "VALID"), 0.0)
    c2 = jax.lax.conv_general_dilated(h, params["w_conv2"], (1, 1), "VALID",
                                      dimension_numbers=dn)
    c2 = c2 + params["b_conv2"][None, :, None, None]
    h2 = jnp.maximum(jax.lax.reduce_window(c2, -jnp.inf, jax.lax.max,
                                           (1, 1, 2, 2), (1, 1, 2, 2), "VALID"), 0.0)
    flat = h2.reshape(h2.shape[0], -1)
    z = jnp.maximum(flat @ params["w_fc1"] + params["b_fc1"], 0.0)
    logits = z @ params["w_fc2"] + params["b_fc2"]
    return jax.nn.log_softmax(logits, axis=-1)


if __name__ == "__main__":
    key = jax.random.PRNGKey(0)
    kx, kx2, k1, k2, k3, k4, k5, k6 = jax.random.split(key, 8)

    def unif(k, shape, fan_in):
        bound = 1.0 / np.sqrt(fan_in)
        return jax.random.uniform(k, shape, jnp.float32, -bound, bound)

    params = {
        "gabor":   jnp.asarray(make_gabor_kernels()),          # 10 fixed 5x5 kernels
        "w_conv2": unif(k1, (C2, C1, K, K), C1 * K * K),        # nn.Conv2d(10, 20, 5)
        "b_conv2": unif(k2, (C2,),          C1 * K * K),
        "w_fc1":   unif(k3, (FEAT, NH),     FEAT),              # nn.Linear(320, 50)
        "b_fc1":   unif(k4, (NH,),          FEAT),
        "w_fc2":   unif(k5, (NH, NCLS),     NH),                # nn.Linear(50, 10)
        "b_fc2":   unif(k6, (NCLS,),        NH),
    }

    fwd = jax.jit(network_gabor_forward)

    # --- small demo batch; tile chosen so the grid still has >= 2 steps (v7x TCs) ---
    B = 2
    x = jax.random.normal(kx, (B, 1, IMG, IMG), dtype=jnp.float32)
    prepped_small = prepare_params(params, tile=max(1, min(8, B // 2)))
    out = jax.block_until_ready(fwd(x, prepped_small))
    assert out.shape == (B, NCLS) and out.dtype == jnp.float32
    assert np.allclose(np.exp(np.asarray(out)).sum(axis=1), 1.0, atol=1e-4)
    ref = np.asarray(jax.block_until_ready(reference_forward(x, params)))
    assert float(np.max(np.abs(np.asarray(out) - ref))) < 0.2

    # --- larger batch exercising the 8-image tile and the remainder-padding path ---
    B2 = 13
    x2 = jax.random.normal(kx2, (B2, 1, IMG, IMG), dtype=jnp.float32)
    prepped8 = prepare_params(params, tile=8)
    out2 = jax.block_until_ready(fwd(x2, prepped8))
    assert out2.shape == (B2, NCLS)
    assert np.allclose(np.exp(np.asarray(out2)).sum(axis=1), 1.0, atol=1e-4)
    ref2 = np.asarray(jax.block_until_ready(reference_forward(x2, params)))
    assert float(np.max(np.abs(np.asarray(out2) - ref2))) < 0.2

    print("KERNEL_OK")
</pallas_src>

<mosaic_0001>
module attributes {stable_mosaic.version = 11 : i64} {
  func.func @_gabor_net_kernel(%arg0: i32, %arg1: memref<1x28x28xf32, #tpu.memory_space<vmem>>, %arg2: memref<2x5x28x120xf32, #tpu.memory_space<vmem>>, %arg3: memref<16x24xf32, #tpu.memory_space<vmem>>, %arg4: memref<16x24xf32, #tpu.memory_space<vmem>>, %arg5: memref<2x5x120x80xf32, #tpu.memory_space<vmem>>, %arg6: memref<1x80xf32, #tpu.memory_space<vmem>>, %arg7: memref<4x1x8xf32, #tpu.memory_space<vmem>>, %arg8: memref<4x1x8xf32, #tpu.memory_space<vmem>>, %arg9: memref<4x80x50xf32, #tpu.memory_space<vmem>>, %arg10: memref<1x50xf32, #tpu.memory_space<vmem>>, %arg11: memref<50x10xf32, #tpu.memory_space<vmem>>, %arg12: memref<1x10xf32, #tpu.memory_space<vmem>>, %arg13: memref<1x1x10xf32, #tpu.memory_space<vmem>>, %arg14: memref<1x16x120xf32, #tpu.memory_space<vmem>>) attributes {dimension_semantics = [#tpu.dimension_semantics<parallel>], iteration_bounds = array<i64: 2>, scalar_prefetch = 0 : i64, scratch_operands = 1 : i64, tpu.core_type = #tpu.core_type<tc>, window_params = [{transform_indices = @transform_0, window_bounds = array<i64: 1, 28, 28>}, {pipeline_mode = #tpu.pipeline_mode<synchronous>, transform_indices = @transform_1, window_bounds = array<i64: 2, 5, 28, 120>}, {pipeline_mode = #tpu.pipeline_mode<synchronous>, transform_indices = @transform_2, window_bounds = array<i64: 16, 24>}, {pipeline_mode = #tpu.pipeline_mode<synchronous>, transform_indices = @transform_3, window_bounds = array<i64: 16, 24>}, {pipeline_mode = #tpu.pipeline_mode<synchronous>, transform_indices = @transform_4, window_bounds = array<i64: 2, 5, 120, 80>}, {pipeline_mode = #tpu.pipeline_mode<synchronous>, transform_indices = @transform_5, window_bounds = array<i64: 1, 80>}, {pipeline_mode = #tpu.pipeline_mode<synchronous>, transform_indices = @transform_6, window_bounds = array<i64: 4, 1, 8>}, {pipeline_mode = #tpu.pipeline_mode<synchronous>, transform_indices = @transform_7, window_bounds = array<i64: 4, 1, 8>}, {pipeline_mode = #tpu.pipeline_mode<synchronous>, transform_indices = @transform_8, window_bounds = array<i64: 4, 80, 50>}, {pipeline_mode = #tpu.pipeline_mode<synchronous>, transform_indices = @transform_9, window_bounds = array<i64: 1, 50>}, {pipeline_mode = #tpu.pipeline_mode<synchronous>, transform_indices = @transform_10, window_bounds = array<i64: 50, 10>}, {pipeline_mode = #tpu.pipeline_mode<synchronous>, transform_indices = @transform_11, window_bounds = array<i64: 1, 10>}, {transform_indices = @transform_12, window_bounds = array<i64: 1, 1, 10>}]} {
    %c0 = arith.constant 0 : index
    %c0_0 = arith.constant 0 : index
    %c0_1 = arith.constant 0 : index
    %0 = vector.load %arg1[%c0, %c0_0, %c0_1] : memref<1x28x28xf32, #tpu.memory_space<vmem>>, vector<1x24x28xf32>
    %1 = vector.shape_cast %0 : vector<1x24x28xf32> to vector<24x28xf32>
    %c0_2 = arith.constant 0 : index
    %c0_3 = arith.constant 0 : index
    %c0_4 = arith.constant 0 : index
    %c0_5 = arith.constant 0 : index
    %2 = vector.load %arg2[%c0_2, %c0_3, %c0_4, %c0_5] : memref<2x5x28x120xf32, #tpu.memory_space<vmem>>, vector<1x1x28x120xf32>
    %3 = vector.shape_cast %2 : vector<1x1x28x120xf32> to vector<28x120xf32>
    %cst = arith.constant dense<0.000000e+00> : vector<24x120xf32>
    %4 = tpu.matmul %1, %3, %cst {dimension_numbers = #tpu.dot_dimension_numbers<[1], [0], [0], [1], [0, 0, 1, 1], [], []>} : vector<24x28xf32>, vector<28x120xf32>, vector<24x120xf32> -> vector<24x120xf32>
    %c0_6 = arith.constant 0 : index
    %c1 = arith.constant 1 : index
    %c0_7 = arith.constant 0 : index
    %5 = vector.load %arg1[%c0_6, %c1, %c0_7] : memref<1x28x28xf32, #tpu.memory_space<vmem>>, vector<1x24x28xf32>
    %6 = vector.shape_cast %5 : vector<1x24x28xf32> to vector<24x28xf32>
    %c0_8 = arith.constant 0 : index
    %c1_9 = arith.constant 1 : index
    %c0_10 = arith.constant 0 : index
    %c0_11 = arith.constant 0 : index
    %7 = vector.load %arg2[%c0_8, %c1_9, %c0_10, %c0_11] : memref<2x5x28x120xf32, #tpu.memory_space<vmem>>, vector<1x1x28x120xf32>
    %8 = vector.shape_cast %7 : vector<1x1x28x120xf32> to vector<28x120xf32>
    %cst_12 = arith.constant dense<0.000000e+00> : vector<24x120xf32>
    %9 = tpu.matmul %6, %8, %cst_12 {dimension_numbers = #tpu.dot_dimension_numbers<[1], [0], [0], [1], [0, 0, 1, 1], [], []>} : vector<24x28xf32>, vector<28x120xf32>, vector<24x120xf32> -> vector<24x120xf32>
    %10 = arith.addf %4, %9 : vector<24x120xf32>
    %c0_13 = arith.constant 0 : index
    %c2 = arith.constant 2 : index
    %c0_14 = arith.constant 0 : index
    %11 = vector.load %arg1[%c0_13, %c2, %c0_14] : memref<1x28x28xf32, #tpu.memory_space<vmem>>, vector<1x24x28xf32>
    %12 = vector.shape_cast %11 : vector<1x24x28xf32> to vector<24x28xf32>
    %c0_15 = arith.constant 0 : index
    %c2_16 = arith.constant 2 : index
    %c0_17 = arith.constant 0 : index
    %c0_18 = arith.constant 0 : index
    %13 = vector.load %arg2[%c0_15, %c2_16, %c0_17, %c0_18] : memref<2x5x28x120xf32, #tpu.memory_space<vmem>>, vector<1x1x28x120xf32>
    %14 = vector.shape_cast %13 : vector<1x1x28x120xf32> to vector<28x120xf32>
    %cst_19 = arith.constant dense<0.000000e+00> : vector<24x120xf32>
    %15 = tpu.matmul %12, %14, %cst_19 {dimension_numbers = #tpu.dot_dimension_numbers<[1], [0], [0], [1], [0, 0, 1, 1], [], []>} : vector<24x28xf32>, vector<28x120xf32>, vector<24x120xf32> -> vector<24x120xf32>
    %16 = arith.addf %10, %15 : vector<24x120xf32>
    %c0_20 = arith.constant 0 : index
    %c3 = arith.constant 3 : index
    %c0_21 = arith.constant 0 : index
    %17 = vector.load %arg1[%c0_20, %c3, %c0_21] : memref<1x28x28xf32, #tpu.memory_space<vmem>>, vector<1x24x28xf32>
    %18 = vector.shape_cast %17 : vector<1x24x28xf32> to vector<24x28xf32>
    %c0_22 = arith.constant 0 : index
    %c3_23 = arith.constant 3 : index
    %c0_24 = arith.constant 0 : index
    %c0_25 = arith.constant 0 : index
    %19 = vector.load %arg2[%c0_22, %c3_23, %c0_24, %c0_25] : memref<2x5x28x120xf32, #tpu.memory_space<vmem>>, vector<1x1x28x120xf32>
    %20 = vector.shape_cast %19 : vector<1x1x28x120xf32> to vector<28x120xf32>
    %cst_26 = arith.constant dense<0.000000e+00> : vector<24x120xf32>
    %21 = tpu.matmul %18, %20, %cst_26 {dimension_numbers = #tpu.dot_dimension_numbers<[1], [0], [0], [1], [0, 0, 1, 1], [], []>} : vector<24x28xf32>, vector<28x120xf32>, vector<24x120xf32> -> vector<24x120xf32>
    %22 = arith.addf %16, %21 : vector<24x120xf32>
    %c0_27 = arith.constant 0 : index
    %c4 = arith.constant 4 : index
    %c0_28 = arith.constant 0 : index
    %23 = vector.load %arg1[%c0_27, %c4, %c0_28] : memref<1x28x28xf32, #tpu.memory_space<vmem>>, vector<1x24x28xf32>
    %24 = vector.shape_cast %23 : vector<1x24x28xf32> to vector<24x28xf32>
    %c0_29 = arith.constant 0 : index
    %c4_30 = arith.constant 4 : index
    %c0_31 = arith.constant 0 : index
    %c0_32 = arith.constant 0 : index
    %25 = vector.load %arg2[%c0_29, %c4_30, %c0_31, %c0_32] : memref<2x5x28x120xf32, #tpu.memory_space<vmem>>, vector<1x1x28x120xf32>
    %26 = vector.shape_cast %25 : vector<1x1x28x120xf32> to vector<28x120xf32>
    %cst_33 = arith.constant dense<0.000000e+00> : vector<24x120xf32>
    %27 = tpu.matmul %24, %26, %cst_33 {dimension_numbers = #tpu.dot_dimension_numbers<[1], [0], [0], [1], [0, 0, 1, 1], [], []>} : vector<24x28xf32>, vector<28x120xf32>, vector<24x120xf32> -> vector<24x120xf32>
    %28 = arith.addf %22, %27 : vector<24x120xf32>
    %c0_34 = arith.constant 0 : index
    %c0_35 = arith.constant 0 : index
    %c0_36 = arith.constant 0 : index
    %29 = vector.load %arg1[%c0_34, %c0_35, %c0_36] : memref<1x28x28xf32, #tpu.memory_space<vmem>>, vector<1x24x28xf32>
    %30 = vector.shape_cast %29 : vector<1x24x28xf32> to vector<24x28xf32>
    %c1_37 = arith.constant 1 : index
    %c0_38 = arith.constant 0 : index
    %c0_39 = arith.constant 0 : index
    %c0_40 = arith.constant 0 : index
    %31 = vector.load %arg2[%c1_37, %c0_38, %c0_39, %c0_40] : memref<2x5x28x120xf32, #tpu.memory_space<vmem>>, vector<1x1x28x120xf32>
    %32 = vector.shape_cast %31 : vector<1x1x28x120xf32> to vector<28x120xf32>
    %cst_41 = arith.constant dense<0.000000e+00> : vector<24x120xf32>
    %33 = tpu.matmul %30, %32, %cst_41 {dimension_numbers = #tpu.dot_dimension_numbers<[1], [0], [0], [1], [0, 0, 1, 1], [], []>} : vector<24x28xf32>, vector<28x120xf32>, vector<24x120xf32> -> vector<24x120xf32>
    %c0_42 = arith.constant 0 : index
    %c1_43 = arith.constant 1 : index
    %c0_44 = arith.constant 0 : index
    %34 = vector.load %arg1[%c0_42, %c1_43, %c0_44] : memref<1x28x28xf32, #tpu.memory_space<vmem>>, vector<1x24x28xf32>
    %35 = vector.shape_cast %34 : vector<1x24x28xf32> to vector<24x28xf32>
    %c1_45 = arith.constant 1 : index
    %c1_46 = arith.constant 1 : index
    %c0_47 = arith.constant 0 : index
    %c0_48 = arith.constant 0 : index
    %36 = vector.load %arg2[%c1_45, %c1_46, %c0_47, %c0_48] : memref<2x5x28x120xf32, #tpu.memory_space<vmem>>, vector<1x1x28x120xf32>
    %37 = vector.shape_cast %36 : vector<1x1x28x120xf32> to vector<28x120xf32>
    %cst_49 = arith.constant dense<0.000000e+00> : vector<24x120xf32>
    %38 = tpu.matmul %35, %37, %cst_49 {dimension_numbers = #tpu.dot_dimension_numbers<[1], [0], [0], [1], [0, 0, 1, 1], [], []>} : vector<24x28xf32>, vector<28x120xf32>, vector<24x120xf32> -> vector<24x120xf32>
    %39 = arith.addf %33, %38 : vector<24x120xf32>
    %c0_50 = arith.constant 0 : index
    %c2_51 = arith.constant 2 : index
    %c0_52 = arith.constant 0 : index
    %40 = vector.load %arg1[%c0_50, %c2_51, %c0_52] : memref<1x28x28xf32, #tpu.memory_space<vmem>>, vector<1x24x28xf32>
    %41 = vector.shape_cast %40 : vector<1x24x28xf32> to vector<24x28xf32>
    %c1_53 = arith.constant 1 : index
    %c2_54 = arith.constant 2 : index
    %c0_55 = arith.constant 0 : index
    %c0_56 = arith.constant 0 : index
    %42 = vector.load %arg2[%c1_53, %c2_54, %c0_55, %c0_56] : memref<2x5x28x120xf32, #tpu.memory_space<vmem>>, vector<1x1x28x120xf32>
    %43 = vector.shape_cast %42 : vector<1x1x28x120xf32> to vector<28x120xf32>
    %cst_57 = arith.constant dense<0.000000e+00> : vector<24x120xf32>
    %44 = tpu.matmul %41, %43, %cst_57 {dimension_numbers = #tpu.dot_dimension_numbers<[1], [0], [0], [1], [0, 0, 1, 1], [], []>} : vector<24x28xf32>, vector<28x120xf32>, vector<24x120xf32> -> vector<24x120xf32>
    %45 = arith.addf %39, %44 : vector<24x120xf32>
    %c0_58 = arith.constant 0 : index
    %c3_59 = arith.constant 3 : index
    %c0_60 = arith.constant 0 : index
    %46 = vector.load %arg1[%c0_58, %c3_59, %c0_60] : memref<1x28x28xf32, #tpu.memory_space<vmem>>, vector<1x24x28xf32>
    %47 = vector.shape_cast %46 : vector<1x24x28xf32> to vector<24x28xf32>
    %c1_61 = arith.constant 1 : index
    %c3_62 = arith.constant 3 : index
    %c0_63 = arith.constant 0 : index
    %c0_64 = arith.constant 0 : index
    %48 = vector.load %arg2[%c1_61, %c3_62, %c0_63, %c0_64] : memref<2x5x28x120xf32, #tpu.memory_space<vmem>>, vector<1x1x28x120xf32>
    %49 = vector.shape_cast %48 : vector<1x1x28x120xf32> to vector<28x120xf32>
    %cst_65 = arith.constant dense<0.000000e+00> : vector<24x120xf32>
    %50 = tpu.matmul %47, %49, %cst_65 {dimension_numbers = #tpu.dot_dimension_numbers<[1], [0], [0], [1], [0, 0, 1, 1], [], []>} : vector<24x28xf32>, vector<28x120xf32>, vector<24x120xf32> -> vector<24x120xf32>
    %51 = arith.addf %45, %50 : vector<24x120xf32>
    %c0_66 = arith.constant 0 : index
    %c4_67 = arith.constant 4 : index
    %c0_68 = arith.constant 0 : index
    %52 = vector.load %arg1[%c0_66, %c4_67, %c0_68] : memref<1x28x28xf32, #tpu.memory_space<vmem>>, vector<1x24x28xf32>
    %53 = vector.shape_cast %52 : vector<1x24x28xf32> to vector<24x28xf32>
    %c1_69 = arith.constant 1 : index
    %c4_70 = arith.constant 4 : index
    %c0_71 = arith.constant 0 : index
    %c0_72 = arith.constant 0 : index
    %54 = vector.load %arg2[%c1_69, %c4_70, %c0_71, %c0_72] : memref<2x5x28x120xf32, #tpu.memory_space<vmem>>, vector<1x1x28x120xf32>
    %55 = vector.shape_cast %54 : vector<1x1x28x120xf32> to vector<28x120xf32>
    %cst_73 = arith.constant dense<0.000000e+00> : vector<24x120xf32>
    %56 = tpu.matmul %53, %55, %cst_73 {dimension_numbers = #tpu.dot_dimension_numbers<[1], [0], [0], [1], [0, 0, 1, 1], [], []>} : vector<24x28xf32>, vector<28x120xf32>, vector<24x120xf32> -> vector<24x120xf32>
    %57 = arith.addf %51, %56 : vector<24x120xf32>
    %58 = arith.maximumf %28, %57 : vector<24x120xf32>
    %c0_74 = arith.constant 0 : index
    %c0_75 = arith.constant 0 : index
    %59 = vector.load %arg3[%c0_74, %c0_75] : memref<16x24xf32, #tpu.memory_space<vmem>>, vector<16x24xf32>
    %cst_76 = arith.constant dense<0.000000e+00> : vector<16x120xf32>
    %60 = tpu.matmul %59, %58, %cst_76 {dimension_numbers = #tpu.dot_dimension_numbers<[1], [0], [0], [1], [0, 0, 1, 1], [], []>} : vector<16x24xf32>, vector<24x120xf32>, vector<16x120xf32> -> vector<16x120xf32>
    %c0_77 = arith.constant 0 : index
    %c0_78 = arith.constant 0 : index
    %61 = vector.load %arg4[%c0_77, %c0_78] : memref<16x24xf32, #tpu.memory_space<vmem>>, vector<16x24xf32>
    %cst_79 = arith.constant dense<0.000000e+00> : vector<16x120xf32>
    %62 = tpu.matmul %61, %58, %cst_79 {dimension_numbers = #tpu.dot_dimension_numbers<[1], [0], [0], [1], [0, 0, 1, 1], [], []>} : vector<16x24xf32>, vector<24x120xf32>, vector<16x120xf32> -> vector<16x120xf32>
    %63 = arith.maximumf %60, %62 : vector<16x120xf32>
    %cst_80 = arith.constant 0.000000e+00 : f32
    %64 = vector.broadcast %cst_80 : f32 to vector<16x120xf32>
    %65 = arith.maximumf %63, %64 : vector<16x120xf32>
    %66 = vector.shape_cast %65 : vector<16x120xf32> to vector<1x16x120xf32>
    %c0_81 = arith.constant 0 : index
    %c0_82 = arith.constant 0 : index
    %c0_83 = arith.constant 0 : index
    %67 = vector.load %arg14[%c0_81, %c0_82, %c0_83] : memref<1x16x120xf32, #tpu.memory_space<vmem>>, vector<1x16x120xf32>
    tpu.vector_store %arg14[%c0_81, %c0_82, %c0_83], %66 {strides = array<i32>} : memref<1x16x120xf32, #tpu.memory_space<vmem>>, vector<1x16x120xf32>,
    %c0_84 = arith.constant 0 : index
    %c0_85 = arith.constant 0 : index
    %c0_86 = arith.constant 0 : index
    %68 = vector.load %arg14[%c0_84, %c0_85, %c0_86] : memref<1x16x120xf32, #tpu.memory_space<vmem>>, vector<1x8x120xf32>
    %69 = vector.shape_cast %68 : vector<1x8x120xf32> to vector<8x120xf32>
    %c0_87 = arith.constant 0 : index
    %c0_88 = arith.constant 0 : index
    %c0_89 = arith.constant 0 : index
    %c0_90 = arith.constant 0 : index
    %70 = vector.load %arg5[%c0_87, %c0_88, %c0_89, %c0_90] : memref<2x5x120x80xf32, #tpu.memory_space<vmem>>, vector<1x1x120x80xf32>
    %71 = vector.shape_cast %70 : vector<1x1x120x80xf32> to vector<120x80xf32>
    %cst_91 = arith.constant dense<0.000000e+00> : vector<8x80xf32>
    %72 = tpu.matmul %69, %71, %cst_91 {dimension_numbers = #tpu.dot_dimension_numbers<[1], [0], [0], [1], [0, 0, 1, 1], [], []>} : vector<8x120xf32>, vector<120x80xf32>, vector<8x80xf32> -> vector<8x80xf32>
    %c0_92 = arith.constant 0 : index
    %c1_93 = arith.constant 1 : index
    %c0_94 = arith.constant 0 : index
    %73 = vector.load %arg14[%c0_92, %c1_93, %c0_94] : memref<1x16x120xf32, #tpu.memory_space<vmem>>, vector<1x8x120xf32>
    %74 = vector.shape_cast %73 : vector<1x8x120xf32> to vector<8x120xf32>
    %c0_95 = arith.constant 0 : index
    %c1_96 = arith.constant 1 : index
    %c0_97 = arith.constant 0 : index
    %c0_98 = arith.constant 0 : index
    %75 = vector.load %arg5[%c0_95, %c1_96, %c0_97, %c0_98] : memref<2x5x120x80xf32, #tpu.memory_space<vmem>>, vector<1x1x120x80xf32>
    %76 = vector.shape_cast %75 : vector<1x1x120x80xf32> to vector<120x80xf32>
    %cst_99 = arith.constant dense<0.000000e+00> : vector<8x80xf32>
    %77 = tpu.matmul %74, %76, %cst_99 {dimension_numbers = #tpu.dot_dimension_numbers<[1], [0], [0], [1], [0, 0, 1, 1], [], []>} : vector<8x120xf32>, vector<120x80xf32>, vector<8x80xf32> -> vector<8x80xf32>
    %78 = arith.addf %72, %77 : vector<8x80xf32>
    %c0_100 = arith.constant 0 : index
    %c2_101 = arith.constant 2 : index
    %c0_102 = arith.constant 0 : index
    %79 = vector.load %arg14[%c0_100, %c2_101, %c0_102] : memref<1x16x120xf32, #tpu.memory_space<vmem>>, vector<1x8x120xf32>
    %80 = vector.shape_cast %79 : vector<1x8x120xf32> to vector<8x120xf32>
    %c0_103 = arith.constant 0 : index
    %c2_104 = arith.constant 2 : index
    %c0_105 = arith.constant 0 : index
    %c0_106 = arith.constant 0 : index
    %81 = vector.load %arg5[%c0_103, %c2_104, %c0_105, %c0_106] : memref<2x5x120x80xf32, #tpu.memory_space<vmem>>, vector<1x1x120x80xf32>
    %82 = vector.shape_cast %81 : vector<1x1x120x80xf32> to vector<120x80xf32>
    %cst_107 = arith.constant dense<0.000000e+00> : vector<8x80xf32>
    %83 = tpu.matmul %80, %82, %cst_107 {dimension_numbers = #tpu.dot_dimension_numbers<[1], [0], [0], [1], [0, 0, 1, 1], [], []>} : vector<8x120xf32>, vector<120x80xf32>, vector<8x80xf32> -> vector<8x80xf32>
    %84 = arith.addf %78, %83 : vector<8x80xf32>
    %c0_108 = arith.constant 0 : index
    %c3_109 = arith.constant 3 : index
    %c0_110 = arith.constant 0 : index
    %85 = vector.load %arg14[%c0_108, %c3_109, %c0_110] : memref<1x16x120xf32, #tpu.memory_space<vmem>>, vector<1x8x120xf32>
    %86 = vector.shape_cast %85 : vector<1x8x120xf32> to vector<8x120xf32>
    %c0_111 = arith.constant 0 : index
    %c3_112 = arith.constant 3 : index
    %c0_113 = arith.constant 0 : index
    %c0_114 = arith.constant 0 : index
    %87 = vector.load %arg5[%c0_111, %c3_112, %c0_113, %c0_114] : memref<2x5x120x80xf32, #tpu.memory_space<vmem>>, vector<1x1x120x80xf32>
    %88 = vector.shape_cast %87 : vector<1x1x120x80xf32> to vector<120x80xf32>
    %cst_115 = arith.constant dense<0.000000e+00> : vector<8x80xf32>
    %89 = tpu.matmul %86, %88, %cst_115 {dimension_numbers = #tpu.dot_dimension_numbers<[1], [0], [0], [1], [0, 0, 1, 1], [], []>} : vector<8x120xf32>, vector<120x80xf32>, vector<8x80xf32> -> vector<8x80xf32>
    %90 = arith.addf %84, %89 : vector<8x80xf32>
    %c0_116 = arith.constant 0 : index
    %c4_117 = arith.constant 4 : index
    %c0_118 = arith.constant 0 : index
    %91 = vector.load %arg14[%c0_116, %c4_117, %c0_118] : memref<1x16x120xf32, #tpu.memory_space<vmem>>, vector<1x8x120xf32>
    %92 = vector.shape_cast %91 : vector<1x8x120xf32> to vector<8x120xf32>
    %c0_119 = arith.constant 0 : index
    %c4_120 = arith.constant 4 : index
    %c0_121 = arith.constant 0 : index
    %c0_122 = arith.constant 0 : index
    %93 = vector.load %arg5[%c0_119, %c4_120, %c0_121, %c0_122] : memref<2x5x120x80xf32, #tpu.memory_space<vmem>>, vector<1x1x120x80xf32>
    %94 = vector.shape_cast %93 : vector<1x1x120x80xf32> to vector<120x80xf32>
    %cst_123 = arith.constant dense<0.000000e+00> : vector<8x80xf32>
    %95 = tpu.matmul %92, %94, %cst_123 {dimension_numbers = #tpu.dot_dimension_numbers<[1], [0], [0], [1], [0, 0, 1, 1], [], []>} : vector<8x120xf32>, vector<120x80xf32>, vector<8x80xf32> -> vector<8x80xf32>
    %96 = arith.addf %90, %95 : vector<8x80xf32>
    %c0_124 = arith.constant 0 : index
    %c0_125 = arith.constant 0 : index
    %c0_126 = arith.constant 0 : index
    %97 = vector.load %arg14[%c0_124, %c0_125, %c0_126] : memref<1x16x120xf32, #tpu.memory_space<vmem>>, vector<1x8x120xf32>
    %98 = vector.shape_cast %97 : vector<1x8x120xf32> to vector<8x120xf32>
    %c1_127 = arith.constant 1 : index
    %c0_128 = arith.constant 0 : index
    %c0_129 = arith.constant 0 : index
    %c0_130 = arith.constant 0 : index
    %99 = vector.load %arg5[%c1_127, %c0_128, %c0_129, %c0_130] : memref<2x5x120x80xf32, #tpu.memory_space<vmem>>, vector<1x1x120x80xf32>
    %100 = vector.shape_cast %99 : vector<1x1x120x80xf32> to vector<120x80xf32>
    %cst_131 = arith.constant dense<0.000000e+00> : vector<8x80xf32>
    %101 = tpu.matmul %98, %100, %cst_131 {dimension_numbers = #tpu.dot_dimension_numbers<[1], [0], [0], [1], [0, 0, 1, 1], [], []>} : vector<8x120xf32>, vector<120x80xf32>, vector<8x80xf32> -> vector<8x80xf32>
    %c0_132 = arith.constant 0 : index
    %c1_133 = arith.constant 1 : index
    %c0_134 = arith.constant 0 : index
    %102 = vector.load %arg14[%c0_132, %c1_133, %c0_134] : memref<1x16x120xf32, #tpu.memory_space<vmem>>, vector<1x8x120xf32>
    %103 = vector.shape_cast %102 : vector<1x8x120xf32> to vector<8x120xf32>
    %c1_135 = arith.constant 1 : index
    %c1_136 = arith.constant 1 : index
    %c0_137 = arith.constant 0 : index
    %c0_138 = arith.constant 0 : index
    %104 = vector.load %arg5[%c1_135, %c1_136, %c0_137, %c0_138] : memref<2x5x120x80xf32, #tpu.memory_space<vmem>>, vector<1x1x120x80xf32>
    %105 = vector.shape_cast %104 : vector<1x1x120x80xf32> to vector<120x80xf32>
    %cst_139 = arith.constant dense<0.000000e+00> : vector<8x80xf32>
    %106 = tpu.matmul %103, %105, %cst_139 {dimension_numbers = #tpu.dot_dimension_numbers<[1], [0], [0], [1], [0, 0, 1, 1], [], []>} : vector<8x120xf32>, vector<120x80xf32>, vector<8x80xf32> -> vector<8x80xf32>
    %107 = arith.addf %101, %106 : vector<8x80xf32>
    %c0_140 = arith.constant 0 : index
    %c2_141 = arith.constant 2 : index
    %c0_142 = arith.constant 0 : index
    %108 = vector.load %arg14[%c0_140, %c2_141, %c0_142] : memref<1x16x120xf32, #tpu.memory_space<vmem>>, vector<1x8x120xf32>
    %109 = vector.shape_cast %108 : vector<1x8x120xf32> to vector<8x120xf32>
    %c1_143 = arith.constant 1 : index
    %c2_144 = arith.constant 2 : index
    %c0_145 = arith.constant 0 : index
    %c0_146 = arith.constant 0 : index
    %110 = vector.load %arg5[%c1_143, %c2_144, %c0_145, %c0_146] : memref<2x5x120x80xf32, #tpu.memory_space<vmem>>, vector<1x1x120x80xf32>
    %111 = vector.shape_cast %110 : vector<1x1x120x80xf32> to vector<120x80xf32>
    %cst_147 = arith.constant dense<0.000000e+00> : vector<8x80xf32>
    %112 = tpu.matmul %109, %111, %cst_147 {dimension_numbers = #tpu.dot_dimension_numbers<[1], [0], [0], [1], [0, 0, 1, 1], [], []>} : vector<8x120xf32>, vector<120x80xf32>, vector<8x80xf32> -> vector<8x80xf32>
    %113 = arith.addf %107, %112 : vector<8x80xf32>
    %c0_148 = arith.constant 0 : index
    %c3_149 = arith.constant 3 : index
    %c0_150 = arith.constant 0 : index
    %114 = vector.load %arg14[%c0_148, %c3_149, %c0_150] : memref<1x16x120xf32, #tpu.memory_space<vmem>>, vector<1x8x120xf32>
    %115 = vector.shape_cast %114 : vector<1x8x120xf32> to vector<8x120xf32>
    %c1_151 = arith.constant 1 : index
    %c3_152 = arith.constant 3 : index
    %c0_153 = arith.constant 0 : index
    %c0_154 = arith.constant 0 : index
    %116 = vector.load %arg5[%c1_151, %c3_152, %c0_153, %c0_154] : memref<2x5x120x80xf32, #tpu.memory_space<vmem>>, vector<1x1x120x80xf32>
    %117 = vector.shape_cast %116 : vector<1x1x120x80xf32> to vector<120x80xf32>
    %cst_155 = arith.constant dense<0.000000e+00> : vector<8x80xf32>
    %118 = tpu.matmul %115, %117, %cst_155 {dimension_numbers = #tpu.dot_dimension_numbers<[1], [0], [0], [1], [0, 0, 1, 1], [], []>} : vector<8x120xf32>, vector<120x80xf32>, vector<8x80xf32> -> vector<8x80xf32>
    %119 = arith.addf %113, %118 : vector<8x80xf32>
    %c0_156 = arith.constant 0 : index
    %c4_157 = arith.constant 4 : index
    %c0_158 = arith.constant 0 : index
    %120 = vector.load %arg14[%c0_156, %c4_157, %c0_158] : memref<1x16x120xf32, #tpu.memory_space<vmem>>, vector<1x8x120xf32>
    %121 = vector.shape_cast %120 : vector<1x8x120xf32> to vector<8x120xf32>
    %c1_159 = arith.constant 1 : index
    %c4_160 = arith.constant 4 : index
    %c0_161 = arith.constant 0 : index
    %c0_162 = arith.constant 0 : index
    %122 = vector.load %arg5[%c1_159, %c4_160, %c0_161, %c0_162] : memref<2x5x120x80xf32, #tpu.memory_space<vmem>>, vector<1x1x120x80xf32>
    %123 = vector.shape_cast %122 : vector<1x1x120x80xf32> to vector<120x80xf32>
    %cst_163 = arith.constant dense<0.000000e+00> : vector<8x80xf32>
    %124 = tpu.matmul %121, %123, %cst_163 {dimension_numbers = #tpu.dot_dimension_numbers<[1], [0], [0], [1], [0, 0, 1, 1], [], []>} : vector<8x120xf32>, vector<120x80xf32>, vector<8x80xf32> -> vector<8x80xf32>
    %125 = arith.addf %119, %124 : vector<8x80xf32>
    %126 = arith.maximumf %96, %125 : vector<8x80xf32>
    %c0_164 = arith.constant 0 : index
    %c0_165 = arith.constant 0 : index
    %127 = vector.load %arg6[%c0_164, %c0_165] : memref<1x80xf32, #tpu.memory_space<vmem>>, vector<1x80xf32>
    %128 = vector.broadcast %127 : vector<1x80xf32> to vector<8x80xf32>
    %129 = arith.addf %126, %128 : vector<8x80xf32>
    %c0_166 = arith.constant 0 : index
    %c0_167 = arith.constant 0 : index
    %c0_168 = arith.constant 0 : index
    %130 = vector.load %arg7[%c0_166, %c0_167, %c0_168] : memref<4x1x8xf32, #tpu.memory_space<vmem>>, vector<1x1x8xf32>
    %131 = vector.shape_cast %130 : vector<1x1x8xf32> to vector<1x8xf32>
    %cst_169 = arith.constant dense<0.000000e+00> : vector<1x80xf32>
    %132 = tpu.matmul %131, %129, %cst_169 {dimension_numbers = #tpu.dot_dimension_numbers<[1], [0], [0], [1], [0, 0, 1, 1], [], []>} : vector<1x8xf32>, vector<8x80xf32>, vector<1x80xf32> -> vector<1x80xf32>
    %c0_170 = arith.constant 0 : index
    %c0_171 = arith.constant 0 : index
    %c0_172 = arith.constant 0 : index
    %133 = vector.load %arg8[%c0_170, %c0_171, %c0_172] : memref<4x1x8xf32, #tpu.memory_space<vmem>>, vector<1x1x8xf32>
    %134 = vector.shape_cast %133 : vector<1x1x8xf32> to vector<1x8xf32>
    %cst_173 = arith.constant dense<0.000000e+00> : vector<1x80xf32>
    %135 = tpu.matmul %134, %129, %cst_173 {dimension_numbers = #tpu.dot_dimension_numbers<[1], [0], [0], [1], [0, 0, 1, 1], [], []>} : vector<1x8xf32>, vector<8x80xf32>, vector<1x80xf32> -> vector<1x80xf32>
    %136 = arith.maximumf %132, %135 : vector<1x80xf32>
    %cst_174 = arith.constant 0.000000e+00 : f32
    %137 = vector.broadcast %cst_174 : f32 to vector<1x80xf32>
    %138 = arith.maximumf %136, %137 : vector<1x80xf32>
    %c0_175 = arith.constant 0 : index
    %c0_176 = arith.constant 0 : index
    %c0_177 = arith.constant 0 : index
    %139 = vector.load %arg9[%c0_175, %c0_176, %c0_177] : memref<4x80x50xf32, #tpu.memory_space<vmem>>, vector<1x80x50xf32>
    %140 = vector.shape_cast %139 : vector<1x80x50xf32> to vector<80x50xf32>
    %cst_178 = arith.constant dense<0.000000e+00> : vector<1x50xf32>
    %141 = tpu.matmul %138, %140, %cst_178 {dimension_numbers = #tpu.dot_dimension_numbers<[1], [0], [0], [1], [0, 0, 1, 1], [], []>} : vector<1x80xf32>, vector<80x50xf32>, vector<1x50xf32> -> vector<1x50xf32>
    %c1_179 = arith.constant 1 : index
    %c0_180 = arith.constant 0 : index
    %c0_181 = arith.constant 0 : index
    %142 = vector.load %arg7[%c1_179, %c0_180, %c0_181] : memref<4x1x8xf32, #tpu.memory_space<vmem>>, vector<1x1x8xf32>
    %143 = vector.shape_cast %142 : vector<1x1x8xf32> to vector<1x8xf32>
    %cst_182 = arith.constant dense<0.000000e+00> : vector<1x80xf32>
    %144 = tpu.matmul %143, %129, %cst_182 {dimension_numbers = #tpu.dot_dimension_numbers<[1], [0], [0], [1], [0, 0, 1, 1], [], []>} : vector<1x8xf32>, vector<8x80xf32>, vector<1x80xf32> -> vector<1x80xf32>
    %c1_183 = arith.constant 1 : index
    %c0_184 = arith.constant 0 : index
    %c0_185 = arith.constant 0 : index
    %145 = vector.load %arg8[%c1_183, %c0_184, %c0_185] : memref<4x1x8xf32, #tpu.memory_space<vmem>>, vector<1x1x8xf32>
    %146 = vector.shape_cast %145 : vector<1x1x8xf32> to vector<1x8xf32>
    %cst_186 = arith.constant dense<0.000000e+00> : vector<1x80xf32>
    %147 = tpu.matmul %146, %129, %cst_186 {dimension_numbers = #tpu.dot_dimension_numbers<[1], [0], [0], [1], [0, 0, 1, 1], [], []>} : vector<1x8xf32>, vector<8x80xf32>, vector<1x80xf32> -> vector<1x80xf32>
    %148 = arith.maximumf %144, %147 : vector<1x80xf32>
    %cst_187 = arith.constant 0.000000e+00 : f32
    %149 = vector.broadcast %cst_187 : f32 to vector<1x80xf32>
    %150 = arith.maximumf %148, %149 : vector<1x80xf32>
    %c1_188 = arith.constant 1 : index
    %c0_189 = arith.constant 0 : index
    %c0_190 = arith.constant 0 : index
    %151 = vector.load %arg9[%c1_188, %c0_189, %c0_190] : memref<4x80x50xf32, #tpu.memory_space<vmem>>, vector<1x80x50xf32>
    %152 = vector.shape_cast %151 : vector<1x80x50xf32> to vector<80x50xf32>
    %cst_191 = arith.constant dense<0.000000e+00> : vector<1x50xf32>
    %153 = tpu.matmul %150, %152, %cst_191 {dimension_numbers = #tpu.dot_dimension_numbers<[1], [0], [0], [1], [0, 0, 1, 1], [], []>} : vector<1x80xf32>, vector<80x50xf32>, vector<1x50xf32> -> vector<1x50xf32>
    %154 = arith.addf %141, %153 : vector<1x50xf32>
    %c2_192 = arith.constant 2 : index
    %c0_193 = arith.constant 0 : index
    %c0_194 = arith.constant 0 : index
    %155 = vector.load %arg7[%c2_192, %c0_193, %c0_194] : memref<4x1x8xf32, #tpu.memory_space<vmem>>, vector<1x1x8xf32>
    %156 = vector.shape_cast %155 : vector<1x1x8xf32> to vector<1x8xf32>
    %cst_195 = arith.constant dense<0.000000e+00> : vector<1x80xf32>
    %157 = tpu.matmul %156, %129, %cst_195 {dimension_numbers = #tpu.dot_dimension_numbers<[1], [0], [0], [1], [0, 0, 1, 1], [], []>} : vector<1x8xf32>, vector<8x80xf32>, vector<1x80xf32> -> vector<1x80xf32>
    %c2_196 = arith.constant 2 : index
    %c0_197 = arith.constant 0 : index
    %c0_198 = arith.constant 0 : index
    %158 = vector.load %arg8[%c2_196, %c0_197, %c0_198] : memref<4x1x8xf32, #tpu.memory_space<vmem>>, vector<1x1x8xf32>
    %159 = vector.shape_cast %158 : vector<1x1x8xf32> to vector<1x8xf32>
    %cst_199 = arith.constant dense<0.000000e+00> : vector<1x80xf32>
    %160 = tpu.matmul %159, %129, %cst_199 {dimension_numbers = #tpu.dot_dimension_numbers<[1], [0], [0], [1], [0, 0, 1, 1], [], []>} : vector<1x8xf32>, vector<8x80xf32>, vector<1x80xf32> -> vector<1x80xf32>
    %161 = arith.maximumf %157, %160 : vector<1x80xf32>
    %cst_200 = arith.constant 0.000000e+00 : f32
    %162 = vector.broadcast %cst_200 : f32 to vector<1x80xf32>
    %163 = arith.maximumf %161, %162 : vector<1x80xf32>
    %c2_201 = arith.constant 2 : index
    %c0_202 = arith.constant 0 : index
    %c0_203 = arith.constant 0 : index
    %164 = vector.load %arg9[%c2_201, %c0_202, %c0_203] : memref<4x80x50xf32, #tpu.memory_space<vmem>>, vector<1x80x50xf32>
    %165 = vector.shape_cast %164 : vector<1x80x50xf32> to vector<80x50xf32>
    %cst_204 = arith.constant dense<0.000000e+00> : vector<1x50xf32>
    %166 = tpu.matmul %163, %165, %cst_204 {dimension_numbers = #tpu.dot_dimension_numbers<[1], [0], [0], [1], [0, 0, 1, 1], [], []>} : vector<1x80xf32>, vector<80x50xf32>, vector<1x50xf32> -> vector<1x50xf32>
    %167 = arith.addf %154, %166 : vector<1x50xf32>
    %c3_205 = arith.constant 3 : index
    %c0_206 = arith.constant 0 : index
    %c0_207 = arith.constant 0 : index
    %168 = vector.load %arg7[%c3_205, %c0_206, %c0_207] : memref<4x1x8xf32, #tpu.memory_space<vmem>>, vector<1x1x8xf32>
    %169 = vector.shape_cast %168 : vector<1x1x8xf32> to vector<1x8xf32>
    %cst_208 = arith.constant dense<0.000000e+00> : vector<1x80xf32>
    %170 = tpu.matmul %169, %129, %cst_208 {dimension_numbers = #tpu.dot_dimension_numbers<[1], [0], [0], [1], [0, 0, 1, 1], [], []>} : vector<1x8xf32>, vector<8x80xf32>, vector<1x80xf32> -> vector<1x80xf32>
    %c3_209 = arith.constant 3 : index
    %c0_210 = arith.constant 0 : index
    %c0_211 = arith.constant 0 : index
    %171 = vector.load %arg8[%c3_209, %c0_210, %c0_211] : memref<4x1x8xf32, #tpu.memory_space<vmem>>, vector<1x1x8xf32>
    %172 = vector.shape_cast %171 : vector<1x1x8xf32> to vector<1x8xf32>
    %cst_212 = arith.constant dense<0.000000e+00> : vector<1x80xf32>
    %173 = tpu.matmul %172, %129, %cst_212 {dimension_numbers = #tpu.dot_dimension_numbers<[1], [0], [0], [1], [0, 0, 1, 1], [], []>} : vector<1x8xf32>, vector<8x80xf32>, vector<1x80xf32> -> vector<1x80xf32>
    %174 = arith.maximumf %170, %173 : vector<1x80xf32>
    %cst_213 = arith.constant 0.000000e+00 : f32
    %175 = vector.broadcast %cst_213 : f32 to vector<1x80xf32>
    %176 = arith.maximumf %174, %175 : vector<1x80xf32>
    %c3_214 = arith.constant 3 : index
    %c0_215 = arith.constant 0 : index
    %c0_216 = arith.constant 0 : index
    %177 = vector.load %arg9[%c3_214, %c0_215, %c0_216] : memref<4x80x50xf32, #tpu.memory_space<vmem>>, vector<1x80x50xf32>
    %178 = vector.shape_cast %177 : vector<1x80x50xf32> to vector<80x50xf32>
    %cst_217 = arith.constant dense<0.000000e+00> : vector<1x50xf32>
    %179 = tpu.matmul %176, %178, %cst_217 {dimension_numbers = #tpu.dot_dimension_numbers<[1], [0], [0], [1], [0, 0, 1, 1], [], []>} : vector<1x80xf32>, vector<80x50xf32>, vector<1x50xf32> -> vector<1x50xf32>
    %180 = arith.addf %167, %179 : vector<1x50xf32>
    %c0_218 = arith.constant 0 : index
    %c0_219 = arith.constant 0 : index
    %181 = vector.load %arg10[%c0_218, %c0_219] : memref<1x50xf32, #tpu.memory_space<vmem>>, vector<1x50xf32>
    %182 = arith.addf %180, %181 : vector<1x50xf32>
    %cst_220 = arith.constant 0.000000e+00 : f32
    %183 = vector.broadcast %cst_220 : f32 to vector<1x50xf32>
    %184 = arith.maximumf %182, %183 : vector<1x50xf32>
    %c0_221 = arith.constant 0 : index
    %c0_222 = arith.constant 0 : index
    %185 = vector.load %arg11[%c0_221, %c0_222] : memref<50x10xf32, #tpu.memory_space<vmem>>, vector<50x10xf32>
    %cst_223 = arith.constant dense<0.000000e+00> : vector<1x10xf32>
    %186 = tpu.matmul %184, %185, %cst_223 {dimension_numbers = #tpu.dot_dimension_numbers<[1], [0], [0], [1], [0, 0, 1, 1], [], []>} : vector<1x50xf32>, vector<50x10xf32>, vector<1x10xf32> -> vector<1x10xf32>
    %c0_224 = arith.constant 0 : index
    %c0_225 = arith.constant 0 : index
    %187 = vector.load %arg12[%c0_224, %c0_225] : memref<1x10xf32, #tpu.memory_space<vmem>>, vector<1x10xf32>
    %188 = arith.addf %186, %187 : vector<1x10xf32>
    %cst_226 = arith.constant dense<0xFF800000> : vector<1xf32>
    %189 = vector.multi_reduction <maximumf>, %188, %cst_226 [1] : vector<1x10xf32> to vector<1xf32>
    %190 = vector.shape_cast %189 : vector<1xf32> to vector<1x1xf32>
    %191 = vector.broadcast %190 : vector<1x1xf32> to vector<1x10xf32>
    %192 = arith.subf %188, %191 : vector<1x10xf32>
    %193 = math.exp %192 : vector<1x10xf32>
    %cst_227 = arith.constant dense<0.000000e+00> : vector<1xf32>
    %194 = vector.multi_reduction <add>, %193, %cst_227 [1] : vector<1x10xf32> to vector<1xf32>
    %195 = vector.shape_cast %194 : vector<1xf32> to vector<1x1xf32>
    %196 = math.log %195 : vector<1x1xf32>
    %197 = vector.broadcast %196 : vector<1x1xf32> to vector<1x10xf32>
    %198 = arith.subf %192, %197 : vector<1x10xf32>
    %c0_228 = arith.constant 0 : index
    %c0_229 = arith.constant 0 : index
    %c0_230 = arith.constant 0 : index
    %199 = vector.load %arg13[%c0_228, %c0_229, %c0_230] : memref<1x1x10xf32, #tpu.memory_space<vmem>>, vector<1x1x10xf32>
    %200 = vector.shape_cast %199 : vector<1x1x10xf32> to vector<1x10xf32>
    %201 = vector.shape_cast %198 : vector<1x10xf32> to vector<1x1x10xf32>
    tpu.vector_store %arg13[%c0_228, %c0_229, %c0_230], %201 {strides = array<i32>} : memref<1x1x10xf32, #tpu.memory_space<vmem>>, vector<1x1x10xf32>,
    return
  }
  func.func @transform_0(%arg0: i32) -> (i32, i32, i32) {
    %c0_i32 = arith.constant 0 : i32
    %c0_i32_0 = arith.constant 0 : i32
    %c0_i32_1 = arith.constant 0 : i32
    return %arg0, %c0_i32, %c0_i32_0 : i32, i32, i32
  }
  func.func @transform_1(%arg0: i32) -> (i32, i32, i32, i32) {
    %c0_i32 = arith.constant 0 : i32
    %c0_i32_0 = arith.constant 0 : i32
    %c0_i32_1 = arith.constant 0 : i32
    %c0_i32_2 = arith.constant 0 : i32
    %c0_i32_3 = arith.constant 0 : i32
    return %c0_i32, %c0_i32_0, %c0_i32_1, %c0_i32_2 : i32, i32, i32, i32
  }
  func.func @transform_2(%arg0: i32) -> (i32, i32) {
    %c0_i32 = arith.constant 0 : i32
    %c0_i32_0 = arith.constant 0 : i32
    %c0_i32_1 = arith.constant 0 : i32
    return %c0_i32, %c0_i32_0 : i32, i32
  }
  func.func @transform_3(%arg0: i32) -> (i32, i32) {
    %c0_i32 = arith.constant 0 : i32
    %c0_i32_0 = arith.constant 0 : i32
    %c0_i32_1 = arith.constant 0 : i32
    return %c0_i32, %c0_i32_0 : i32, i32
  }
  func.func @transform_4(%arg0: i32) -> (i32, i32, i32, i32) {
    %c0_i32 = arith.constant 0 : i32
    %c0_i32_0 = arith.constant 0 : i32
    %c0_i32_1 = arith.constant 0 : i32
    %c0_i32_2 = arith.constant 0 : i32
    %c0_i32_3 = arith.constant 0 : i32
    return %c0_i32, %c0_i32_0, %c0_i32_1, %c0_i32_2 : i32, i32, i32, i32
  }
  func.func @transform_5(%arg0: i32) -> (i32, i32) {
    %c0_i32 = arith.constant 0 : i32
    %c0_i32_0 = arith.constant 0 : i32
    %c0_i32_1 = arith.constant 0 : i32
    return %c0_i32, %c0_i32_0 : i32, i32
  }
  func.func @transform_6(%arg0: i32) -> (i32, i32, i32) {
    %c0_i32 = arith.constant 0 : i32
    %c0_i32_0 = arith.constant 0 : i32
    %c0_i32_1 = arith.constant 0 : i32
    %c0_i32_2 = arith.constant 0 : i32
    return %c0_i32, %c0_i32_0, %c0_i32_1 : i32, i32, i32
  }
  func.func @transform_7(%arg0: i32) -> (i32, i32, i32) {
    %c0_i32 = arith.constant 0 : i32
    %c0_i32_0 = arith.constant 0 : i32
    %c0_i32_1 = arith.constant 0 : i32
    %c0_i32_2 = arith.constant 0 : i32
    return %c0_i32, %c0_i32_0, %c0_i32_1 : i32, i32, i32
  }
  func.func @transform_8(%arg0: i32) -> (i32, i32, i32) {
    %c0_i32 = arith.constant 0 : i32
    %c0_i32_0 = arith.constant 0 : i32
    %c0_i32_1 = arith.constant 0 : i32
    %c0_i32_2 = arith.constant 0 : i32
    return %c0_i32, %c0_i32_0, %c0_i32_1 : i32, i32, i32
  }
  func.func @transform_9(%arg0: i32) -> (i32, i32) {
    %c0_i32 = arith.constant 0 : i32
    %c0_i32_0 = arith.constant 0 : i32
    %c0_i32_1 = arith.constant 0 : i32
    return %c0_i32, %c0_i32_0 : i32, i32
  }
  func.func @transform_10(%arg0: i32) -> (i32, i32) {
    %c0_i32 = arith.constant 0 : i32
    %c0_i32_0 = arith.constant 0 : i32
    %c0_i32_1 = arith.constant 0 : i32
    return %c0_i32, %c0_i32_0 : i32, i32
  }
  func.func @transform_11(%arg0: i32) -> (i32, i32) {
    %c0_i32 = arith.constant 0 : i32
    %c0_i32_0 = arith.constant 0 : i32
    %c0_i32_1 = arith.constant 0 : i32
    return %c0_i32, %c0_i32_0 : i32, i32
  }
  func.func @transform_12(%arg0: i32) -> (i32, i32, i32) {
    %c0_i32 = arith.constant 0 : i32
    %c0_i32_0 = arith.constant 0 : i32
    %c0_i32_1 = arith.constant 0 : i32
    return %arg0, %c0_i32, %c0_i32_0 : i32, i32, i32
  }
}

</mosaic_0001>

<llo_original>
// kernel: network_gabor_forward.1
$region0: #{network_gabor_forward.1}
  #allocation0 [shape = 'u32[]', space=smem, size = 0x4, offset = 0x4, fixed_abs, tag = 'smem constant byte address 0x4 - core index']
  #allocation1 [shape = 'u32[72,128]{1,0:T(1,128)}', space=vmem, size = 0x9000, scoped, tag = 'internal scratch']
  #allocation2 [shape = 'f32[1,16,120]{2,1,0:T(8,128)}', space=vmem, size = 0x2000, scoped, tag = 'scratch operand']
  %s0 = inlined_call_operand.vmem [shape: f32[2,28,28], index: 0, kind: input, shape index: {}]
  %s1 = inlined_call_operand.vmem [shape: f32[2,5,28,120], index: 1, kind: input, shape index: {}]
  %s2 = inlined_call_operand.vmem [shape: f32[16,24], index: 2, kind: input, shape index: {}]
  %s3 = inlined_call_operand.vmem [shape: f32[16,24], index: 3, kind: input, shape index: {}]
  %s4 = inlined_call_operand.vmem [shape: f32[2,5,120,80], index: 4, kind: input, shape index: {}]
  %s5 = inlined_call_operand.vmem [shape: f32[1,80], index: 5, kind: input, shape index: {}]
  %s6 = inlined_call_operand.vmem [shape: f32[4,1,8], index: 6, kind: input, shape index: {}]
  %s7 = inlined_call_operand.vmem [shape: f32[4,1,8], index: 7, kind: input, shape index: {}]
  %s8 = inlined_call_operand.vmem [shape: f32[4,80,50], index: 8, kind: input, shape index: {}]
  %s9 = inlined_call_operand.vmem [shape: f32[1,50], index: 9, kind: input, shape index: {}]
  %s10 = inlined_call_operand.vmem [shape: f32[50,10], index: 10, kind: input, shape index: {}]
  %s11 = inlined_call_operand.vmem [shape: f32[1,10], index: 11, kind: input, shape index: {}]
  %s12 = inlined_call_operand.hbm [shape: f32[2,1,10], index: 12, kind: output, shape index: {}]
  %s13 = sld [smem:[#allocation0]]
  $region81: #{network_gabor_forward.1} parent=0
    _
  %s15 = ssub.s32 1, %s13
  %s16 = scalar_select 0, %s15, %s13
  $region1: #{network_gabor_forward.1} parent=0
    #allocation3 [shape = 'u8[1024]{0}', space=vmem, size = 0x400, scoped, tag = 'output window, operand 0']
    #allocation4 [shape = 's32[2]{0}', space=sflag, size = 0x8, scoped, tag = 'scoped memory for network_gabor_forward.1']
    %17 = vsyncpa [#allocation4], 0
    %s18 = scalar_lea.sflag [#allocation4], 1
    %19 = vsyncpa %s18, 0
    loop: start=0, step=1, limit=4
    $region2: #{network_gabor_forward.1} parent=1 // loop_pre_header
      _
    $region3: #{network_gabor_forward.1} parent=1 // loop_header
      %s21 = sphi 0, %s25
      %p22 = scmp.ge.s32.totalorder %s21, 4
      %s31 = sphi 0, %s33
      %s34 = sphi 0, %s31
      %s35 = sphi 0, %s34
      %s51 = sphi 0, %s35
      %s55 = sphi 0, %s55
      %s57 = sphi 0, %s55
      %s58 = sphi 0, %s57
      %s72 = sphi 0, %s58
      %s76 = sphi 0, %s76
      %s78 = sphi 0, %s76
      %s79 = sphi 0, %s78
      %s93 = sphi 0, %s79
      %s97 = sphi 0, %s97
      %s99 = sphi 0, %s97
      %s100 = sphi 0, %s99
      %s114 = sphi 0, %s100
      %s118 = sphi 0, %s118
      %s120 = sphi 0, %s118
      %s121 = sphi 0, %s120
      %s135 = sphi 0, %s121
      %s139 = sphi 0, %s139
      %s141 = sphi 0, %s139
      %s142 = sphi 0, %s141
      %s156 = sphi 0, %s142
      %s160 = sphi 0, %s160
      %s162 = sphi 0, %s160
      %s163 = sphi 0, %s162
      %s177 = sphi 0, %s163
      %s181 = sphi 0, %s181
      %s183 = sphi 0, %s181
      %s184 = sphi 0, %s183
      %s198 = sphi 0, %s184
      %s202 = sphi 0, %s202
      %s204 = sphi 0, %s202
      %s205 = sphi 0, %s204
      %s219 = sphi 0, %s205
      %s223 = sphi 0, %s223
      %s225 = sphi 0, %s223
      %s226 = sphi 0, %s225
      %s240 = sphi 0, %s226
      %s244 = sphi 0, %s244
      %s246 = sphi 0, %s244
      %s247 = sphi 0, %s246
      %s261 = sphi 0, %s247
      %s265 = sphi 0, %s265
      %s267 = sphi 0, %s265
      %s268 = sphi 0, %s267
      %s282 = sphi 0, %s268
      %s288 = sphi 0, %s290
      %s291 = sphi 0, %s288
      %s292 = sphi 0, %s291
      %s308 = sphi 0, %s292
    $region4: #{network_gabor_forward.1} parent=1 // loop_header_branch
      %24 = sbr.rel (%p22) target = $region8
    $region5: #{network_gabor_forward.1} parent=1 // loop_body
      %s26 = ssub.s32 %s21, 1
      %s27 = ssub.s32 %s21, 2
      %s28 = sadd.s32 %s21, 1
      %s29 = ssub.s32 %s21, %s28
      %p30 = scmp.eq.s32.totalorder %s29, 0
      %s32 = sadd.s32 %s31, 1
      %s33 = scalar_select %p30, %s31, %s32
      %p36 = pneg %p30
      %p37 = scmp.eq.s32.totalorder %s21, 1
      %p38 = por %p36, %p37
      %p39 = scmp.ne.s32.totalorder %s31, %s34
      %p40 = scmp.eq.s32.totalorder %s21, 0
      %p41 = por %p39, %p40
      %p42 = scmp.ne.s32.totalorder %s31, %s34
      %p43 = scmp.eq.s32.totalorder %s26, 1
      %p44 = por %p42, %p43
      %p45 = scmp.ne.s32.totalorder %s34, %s35
      %p46 = scmp.eq.s32.totalorder %s26, 0
      %p47 = por %p45, %p46
      %p48 = scmp.ne.s32.totalorder %s34, %s35
      %p49 = scmp.eq.s32.totalorder %s27, 1
      %p50 = por %p48, %p49
      %p52 = scmp.ne.s32.totalorder %s35, %s51
      %p53 = scmp.eq.s32.totalorder %s27, 0
      %p54 = por %p52, %p53
      %s56 = sadd.s32 %s55, 1
      %p59 = scmp.eq.s32.totalorder %s21, 1
      %p60 = scmp.ne.s32.totalorder %s55, %s57
      %p61 = scmp.eq.s32.totalorder %s21, 0
      %p62 = por %p60, %p61
      %p63 = scmp.ne.s32.totalorder %s55, %s57
      %p64 = scmp.eq.s32.totalorder %s26, 1
      %p65 = por %p63, %p64
      %p66 = scmp.ne.s32.totalorder %s57, %s58
      %p67 = scmp.eq.s32.totalorder %s26, 0
      %p68 = por %p66, %p67
      %p69 = scmp.ne.s32.totalorder %s57, %s58
      %p70 = scmp.eq.s32.totalorder %s27, 1
      %p71 = por %p69, %p70
      %p73 = scmp.ne.s32.totalorder %s58, %s72
      %p74 = scmp.eq.s32.totalorder %s27, 0
      %p75 = por %p73, %p74
      %s77 = sadd.s32 %s76, 1
      %p80 = scmp.eq.s32.totalorder %s21, 1
      %p81 = scmp.ne.s32.totalorder %s76, %s78
      %p82 = scmp.eq.s32.totalorder %s21, 0
      %p83 = por %p81, %p82
      %p84 = scmp.ne.s32.totalorder %s76, %s78
      %p85 = scmp.eq.s32.totalorder %s26, 1
      %p86 = por %p84, %p85
      %p87 = scmp.ne.s32.totalorder %s78, %s79
      %p88 = scmp.eq.s32.totalorder %s26, 0
      %p89 = por %p87, %p88
      %p90 = scmp.ne.s32.totalorder %s78, %s79
      %p91 = scmp.eq.s32.totalorder %s27, 1
      %p92 = por %p90, %p91
      %p94 = scmp.ne.s32.totalorder %s79, %s93
      %p95 = scmp.eq.s32.totalorder %s27, 0
      %p96 = por %p94, %p95
      %s98 = sadd.s32 %s97, 1
      %p101 = scmp.eq.s32.totalorder %s21, 1
      %p102 = scmp.ne.s32.totalorder %s97, %s99
      %p103 = scmp.eq.s32.totalorder %s21, 0
      %p104 = por %p102, %p103
      %p105 = scmp.ne.s32.totalorder %s97, %s99
      %p106 = scmp.eq.s32.totalorder %s26, 1
      %p107 = por %p105, %p106
      %p108 = scmp.ne.s32.totalorder %s99, %s100
      %p109 = scmp.eq.s32.totalorder %s26, 0
      %p110 = por %p108, %p109
      %p111 = scmp.ne.s32.totalorder %s99, %s100
      %p112 = scmp.eq.s32.totalorder %s27, 1
      %p113 = por %p111, %p112
      %p115 = scmp.ne.s32.totalorder %s100, %s114
      %p116 = scmp.eq.s32.totalorder %s27, 0
      %p117 = por %p115, %p116
      %s119 = sadd.s32 %s118, 1
      %p122 = scmp.eq.s32.totalorder %s21, 1
      %p123 = scmp.ne.s32.totalorder %s118, %s120
      %p124 = scmp.eq.s32.totalorder %s21, 0
      %p125 = por %p123, %p124
      %p126 = scmp.ne.s32.totalorder %s118, %s120
      %p127 = scmp.eq.s32.totalorder %s26, 1
      %p128 = por %p126, %p127
      %p129 = scmp.ne.s32.totalorder %s120, %s121
      %p130 = scmp.eq.s32.totalorder %s26, 0
      %p131 = por %p129, %p130
      %p132 = scmp.ne.s32.totalorder %s120, %s121
      %p133 = scmp.eq.s32.totalorder %s27, 1
      %p134 = por %p132, %p133
      %p136 = scmp.ne.s32.totalorder %s121, %s135
      %p137 = scmp.eq.s32.totalorder %s27, 0
      %p138 = por %p136, %p137
      %s140 = sadd.s32 %s139, 1
      %p143 = scmp.eq.s32.totalorder %s21, 1
      %p144 = scmp.ne.s32.totalorder %s139, %s141
      %p145 = scmp.eq.s32.totalorder %s21, 0
      %p146 = por %p144, %p145
      %p147 = scmp.ne.s32.totalorder %s139, %s141
      %p148 = scmp.eq.s32.totalorder %s26, 1
      %p149 = por %p147, %p148
      %p150 = scmp.ne.s32.totalorder %s141, %s142
      %p151 = scmp.eq.s32.totalorder %s26, 0
      %p152 = por %p150, %p151
      %p153 = scmp.ne.s32.totalorder %s141, %s142
      %p154 = scmp.eq.s32.totalorder %s27, 1
      %p155 = por %p153, %p154
      %p157 = scmp.ne.s32.totalorder %s142, %s156
      %p158 = scmp.eq.s32.totalorder %s27, 0
      %p159 = por %p157, %p158
      %s161 = sadd.s32 %s160, 1
      %p164 = scmp.eq.s32.totalorder %s21, 1
      %p165 = scmp.ne.s32.totalorder %s160, %s162
      %p166 = scmp.eq.s32.totalorder %s21, 0
      %p167 = por %p165, %p166
      %p168 = scmp.ne.s32.totalorder %s160, %s162
      %p169 = scmp.eq.s32.totalorder %s26, 1
      %p170 = por %p168, %p169
      %p171 = scmp.ne.s32.totalorder %s162, %s163
      %p172 = scmp.eq.s32.totalorder %s26, 0
      %p173 = por %p171, %p172
      %p174 = scmp.ne.s32.totalorder %s162, %s163
      %p175 = scmp.eq.s32.totalorder %s27, 1
      %p176 = por %p174, %p175
      %p178 = scmp.ne.s32.totalorder %s163, %s177
      %p179 = scmp.eq.s32.totalorder %s27, 0
      %p180 = por %p178, %p179
      %s182 = sadd.s32 %s181, 1
      %p185 = scmp.eq.s32.totalorder %s21, 1
      %p186 = scmp.ne.s32.totalorder %s181, %s183
      %p187 = scmp.eq.s32.totalorder %s21, 0
      %p188 = por %p186, %p187
      %p189 = scmp.ne.s32.totalorder %s181, %s183
      %p190 = scmp.eq.s32.totalorder %s26, 1
      %p191 = por %p189, %p190
      %p192 = scmp.ne.s32.totalorder %s183, %s184
      %p193 = scmp.eq.s32.totalorder %s26, 0
      %p194 = por %p192, %p193
      %p195 = scmp.ne.s32.totalorder %s183, %s184
      %p196 = scmp.eq.s32.totalorder %s27, 1
      %p197 = por %p195, %p196
      %p199 = scmp.ne.s32.totalorder %s184, %s198
      %p200 = scmp.eq.s32.totalorder %s27, 0
      %p201 = por %p199, %p200
      %s203 = sadd.s32 %s202, 1
      %p206 = scmp.eq.s32.totalorder %s21, 1
      %p207 = scmp.ne.s32.totalorder %s202, %s204
      %p208 = scmp.eq.s32.totalorder %s21, 0
      %p209 = por %p207, %p208
      %p210 = scmp.ne.s32.totalorder %s202, %s204
      %p211 = scmp.eq.s32.totalorder %s26, 1
      %p212 = por %p210, %p211
      %p213 = scmp.ne.s32.totalorder %s204, %s205
      %p214 = scmp.eq.s32.totalorder %s26, 0
      %p215 = por %p213, %p214
      %p216 = scmp.ne.s32.totalorder %s204, %s205
      %p217 = scmp.eq.s32.totalorder %s27, 1
      %p218 = por %p216, %p217
      %p220 = scmp.ne.s32.totalorder %s205, %s219
      %p221 = scmp.eq.s32.totalorder %s27, 0
      %p222 = por %p220, %p221
      %s224 = sadd.s32 %s223, 1
      %p227 = scmp.eq.s32.totalorder %s21, 1
      %p228 = scmp.ne.s32.totalorder %s223, %s225
      %p229 = scmp.eq.s32.totalorder %s21, 0
      %p230 = por %p228, %p229
      %p231 = scmp.ne.s32.totalorder %s223, %s225
      %p232 = scmp.eq.s32.totalorder %s26, 1
      %p233 = por %p231, %p232
      %p234 = scmp.ne.s32.totalorder %s225, %s226
      %p235 = scmp.eq.s32.totalorder %s26, 0
      %p236 = por %p234, %p235
      %p237 = scmp.ne.s32.totalorder %s225, %s226
      %p238 = scmp.eq.s32.totalorder %s27, 1
      %p239 = por %p237, %p238
      %p241 = scmp.ne.s32.totalorder %s226, %s240
      %p242 = scmp.eq.s32.totalorder %s27, 0
      %p243 = por %p241, %p242
      %s245 = sadd.s32 %s244, 1
      %p248 = scmp.eq.s32.totalorder %s21, 1
      %p249 = scmp.ne.s32.totalorder %s244, %s246
      %p250 = scmp.eq.s32.totalorder %s21, 0
      %p251 = por %p249, %p250
      %p252 = scmp.ne.s32.totalorder %s244, %s246
      %p253 = scmp.eq.s32.totalorder %s26, 1
      %p254 = por %p252, %p253
      %p255 = scmp.ne.s32.totalorder %s246, %s247
      %p256 = scmp.eq.s32.totalorder %s26, 0
      %p257 = por %p255, %p256
      %p258 = scmp.ne.s32.totalorder %s246, %s247
      %p259 = scmp.eq.s32.totalorder %s27, 1
      %p260 = por %p258, %p259
      %p262 = scmp.ne.s32.totalorder %s247, %s261
      %p263 = scmp.eq.s32.totalorder %s27, 0
      %p264 = por %p262, %p263
      %s266 = sadd.s32 %s265, 1
      %p269 = scmp.eq.s32.totalorder %s21, 1
      %p270 = scmp.ne.s32.totalorder %s265, %s267
      %p271 = scmp.eq.s32.totalorder %s21, 0
      %p272 = por %p270, %p271
      %p273 = scmp.ne.s32.totalorder %s265, %s267
      %p274 = scmp.eq.s32.totalorder %s26, 1
      %p275 = por %p273, %p274
      %p276 = scmp.ne.s32.totalorder %s267, %s268
      %p277 = scmp.eq.s32.totalorder %s26, 0
      %p278 = por %p276, %p277
      %p279 = scmp.ne.s32.totalorder %s267, %s268
      %p280 = scmp.eq.s32.totalorder %s27, 1
      %p281 = por %p279, %p280
      %p283 = scmp.ne.s32.totalorder %s268, %s282
      %p284 = scmp.eq.s32.totalorder %s27, 0
      %p285 = por %p283, %p284
      %s286 = ssub.s32 %s21, %s28
      %p287 = scmp.eq.s32.totalorder %s286, 0
      %s289 = sadd.s32 %s288, 1
      %s290 = scalar_select %p287, %s288, %s289
      %p293 = pneg %p287
      %p294 = scmp.eq.s32.totalorder %s21, 1
      %p295 = por %p293, %p294
      %p296 = scmp.ne.s32.totalorder %s288, %s291
      %p297 = scmp.eq.s32.totalorder %s21, 0
      %p298 = por %p296, %p297
      %p299 = scmp.ne.s32.totalorder %s288, %s291
      %p300 = scmp.eq.s32.totalorder %s26, 1
      %p301 = por %p299, %p300
      %p302 = scmp.ne.s32.totalorder %s291, %s292
      %p303 = scmp.eq.s32.totalorder %s26, 0
      %p304 = por %p302, %p303
      %p305 = scmp.ne.s32.totalorder %s291, %s292
      %p306 = scmp.eq.s32.totalorder %s27, 1
      %p307 = por %p305, %p306
      %p309 = scmp.ne.s32.totalorder %s292, %s308
      %p310 = scmp.eq.s32.totalorder %s27, 0
      %p311 = por %p309, %p310
      %p312 = scmp.le.s32.totalorder 1, %s21
      %p313 = scmp.lt.s32.totalorder %s21, 3
      %p314 = pnand %p312, %p313
      %p315 = pneg %p314
      // Predicated region
      $region9: #{network_gabor_forward.1} parent=5 // pred_check
        _
      $region10: #{network_gabor_forward.1} parent=5 // pred_check_branch
        %317 = sbr.rel (%p314) target = $region12
      $region11: #{network_gabor_forward.1} parent=5 // pred_region
        %s318 = ssub.s32 %s21, 1
        // Predicated region
        $region13: #{network_gabor_forward.1} parent=11 // pred_check
          %p319 = pneg %p68
        $region14: #{network_gabor_forward.1} parent=11 // pred_check_branch
          %321 = sbr.rel (%p319) target = $region16
        $region15: #{network_gabor_forward.1} parent=11 // pred_region
          _
        $region16: #{network_gabor_forward.1} parent=11 // pred_fallthru
          _
        // Predicated region
        $region17: #{network_gabor_forward.1} parent=11 // pred_check
          %p322 = pneg %p89
        $region18: #{network_gabor_forward.1} parent=11 // pred_check_branch
          %324 = sbr.rel (%p322) target = $region20
        $region19: #{network_gabor_forward.1} parent=11 // pred_region
          _
        $region20: #{network_gabor_forward.1} parent=11 // pred_fallthru
          _
        // Predicated region
        $region21: #{network_gabor_forward.1} parent=11 // pred_check
          %p325 = pneg %p110
        $region22: #{network_gabor_forward.1} parent=11 // pred_check_branch
          %327 = sbr.rel (%p325) target = $region24
        $region23: #{network_gabor_forward.1} parent=11 // pred_region
          _
        $region24: #{network_gabor_forward.1} parent=11 // pred_fallthru
          _
        // Predicated region
        $region25: #{network_gabor_forward.1} parent=11 // pred_check
          %p328 = pneg %p131
        $region26: #{network_gabor_forward.1} parent=11 // pred_check_branch
          %330 = sbr.rel (%p328) target = $region28
        $region27: #{network_gabor_forward.1} parent=11 // pred_region
          _
        $region28: #{network_gabor_forward.1} parent=11 // pred_fallthru
          _
        // Predicated region
        $region29: #{network_gabor_forward.1} parent=11 // pred_check
          %p331 = pneg %p152
        $region30: #{network_gabor_forward.1} parent=11 // pred_check_branch
          %333 = sbr.rel (%p331) target = $region32
        $region31: #{network_gabor_forward.1} parent=11 // pred_region
          _
        $region32: #{network_gabor_forward.1} parent=11 // pred_fallthru
          _
        // Predicated region
        $region33: #{network_gabor_forward.1} parent=11 // pred_check
          %p334 = pneg %p173
        $region34: #{network_gabor_forward.1} parent=11 // pred_check_branch
          %336 = sbr.rel (%p334) target = $region36
        $region35: #{network_gabor_forward.1} parent=11 // pred_region
          _
        $region36: #{network_gabor_forward.1} parent=11 // pred_fallthru
          _
        // Predicated region
        $region37: #{network_gabor_forward.1} parent=11 // pred_check
          %p337 = pneg %p194
        $region38: #{network_gabor_forward.1} parent=11 // pred_check_branch
          %339 = sbr.rel (%p337) target = $region40
        $region39: #{network_gabor_forward.1} parent=11 // pred_region
          _
        $region40: #{network_gabor_forward.1} parent=11 // pred_fallthru
          _
        // Predicated region
        $region41: #{network_gabor_forward.1} parent=11 // pred_check
          %p340 = pneg %p215
        $region42: #{network_gabor_forward.1} parent=11 // pred_check_branch
          %342 = sbr.rel (%p340) target = $region44
        $region43: #{network_gabor_forward.1} parent=11 // pred_region
          _
        $region44: #{network_gabor_forward.1} parent=11 // pred_fallthru
          _
        // Predicated region
        $region45: #{network_gabor_forward.1} parent=11 // pred_check
          %p343 = pneg %p236
        $region46: #{network_gabor_forward.1} parent=11 // pred_check_branch
          %345 = sbr.rel (%p343) target = $region48
        $region47: #{network_gabor_forward.1} parent=11 // pred_region
          _
        $region48: #{network_gabor_forward.1} parent=11 // pred_fallthru
          _
        // Predicated region
        $region49: #{network_gabor_forward.1} parent=11 // pred_check
          %p346 = pneg %p257
        $region50: #{network_gabor_forward.1} parent=11 // pred_check_branch
          %348 = sbr.rel (%p346) target = $region52
        $region51: #{network_gabor_forward.1} parent=11 // pred_region
          _
        $region52: #{network_gabor_forward.1} parent=11 // pred_fallthru
          _
        // Predicated region
        $region53: #{network_gabor_forward.1} parent=11 // pred_check
          %p349 = pneg %p278
        $region54: #{network_gabor_forward.1} parent=11 // pred_check_branch
          %351 = sbr.rel (%p349) target = $region56
        $region55: #{network_gabor_forward.1} parent=11 // pred_region
          _
        $region56: #{network_gabor_forward.1} parent=11 // pred_fallthru
          _
      $region12: #{network_gabor_forward.1} parent=5 // pred_fallthru
        _
      %p352 = scmp.lt.s32.totalorder %s21, 2
      // Predicated region
      $region57: #{network_gabor_forward.1} parent=5 // pred_check
        %p353 = pneg %p352
      $region58: #{network_gabor_forward.1} parent=5 // pred_check_branch
        %355 = sbr.rel (%p353) target = $region60
      $region59: #{network_gabor_forward.1} parent=5 // pred_region
        // Predicated region
        $region61: #{network_gabor_forward.1} parent=59 // pred_check
          %p356 = pneg %p41
        $region62: #{network_gabor_forward.1} parent=59 // pred_check_branch
          %358 = sbr.rel (%p356) target = $region64
        $region63: #{network_gabor_forward.1} parent=59 // pred_region
          %p359 = scmp.lt.s32.totalorder %s21, 1
          %s360 = scalar_select %p359, %s21, 1
          %s361 = smul.addr %s360, 4
          %s362 = smul.addr %s361, 8
          %s363 = scalar_lea.vmem %s0, %s362
        $region64: #{network_gabor_forward.1} parent=59 // pred_fallthru
          _
      $region60: #{network_gabor_forward.1} parent=5 // pred_fallthru
        _
      %p364 = scmp.le.s32.totalorder 1, %s21
      %p365 = scmp.lt.s32.totalorder %s21, 3
      %p366 = pnand %p364, %p365
      %p367 = pneg %p366
      // Predicated region
      $region65: #{network_gabor_forward.1} parent=5 // pred_check
        _
      $region66: #{network_gabor_forward.1} parent=5 // pred_check_branch
        %369 = sbr.rel (%p366) target = $region68
      $region67: #{network_gabor_forward.1} parent=5 // pred_region
        %s370 = ssub.s32 %s21, 1
        %p371 = scmp.lt.s32.totalorder %s26, 1
        %s372 = scalar_select %p371, %s26, 1
        %s373 = smul.addr %s372, 4
        %s374 = smul.addr %s373, 8
        %s375 = scalar_lea.vmem %s0, %s374
        %p376 = pneg %p47
        %p377 = pneg %p44
        %p378 = pneg %p68
        %p379 = pneg %p65
        %p380 = pneg %p89
        %p381 = pneg %p86
        %p382 = pneg %p110
        %p383 = pneg %p107
        %p384 = pneg %p131
        %p385 = pneg %p128
        %p386 = pneg %p152
        %p387 = pneg %p149
        %p388 = pneg %p173
        %p389 = pneg %p170
        %p390 = pneg %p194
        %p391 = pneg %p191
        %p392 = pneg %p215
        %p393 = pneg %p212
        %p394 = pneg %p236
        %p395 = pneg %p233
        %p396 = pneg %p257
        %p397 = pneg %p254
        %p398 = pneg %p278
        %p399 = pneg %p275
        %p400 = pneg %p304
        %p401 = pneg %p301
        %s402 = sand.u32 %s291, 1
        %s403 = scalar_lea.sflag [#allocation4], %s402
        %s404 = sand.u32 %s291, 1
        %s405 = scalar_lea.vmem [#allocation3], %s404
        %p406 = scmp.lt.s32.totalorder %s26, 1
        %s407 = scalar_select %p406, %s26, 1
        %s408 = smul.addr %s407, 4
        %s409 = smul.addr %s408, 8
        %s410 = scalar_lea.vmem %s0, %s409
        %v411 = vld [vmem:[%s410] sm:$0xff]
        %v412 = vld [vmem:[%s410 + $0x8] sm:$0xff]
        %v413 = vld [vmem:[%s410 + $0x10] sm:$0xff]
        %v414 = vld [vmem:[%s1] sm:$0xff]
        %v415 = vld [vmem:[%s1 + $0x8] sm:$0xff]
        %v416 = vld [vmem:[%s1 + $0x10] sm:$0xff]
        %v417 = vld [vmem:[%s1 + $0x18] sm:$0xf]
        %v418 = vld [vmem:[%s410 + $0x1] sm:$0xff]
        %v419 = vld [vmem:[%s410 + $0x9] sm:$0xff]
        %v420 = vld [vmem:[%s410 + $0x11] sm:$0xff]
        %s421 = scalar_lea.vmem %s1, 32
        %v422 = vld [vmem:[%s421] sm:$0xff]
        %v423 = vld [vmem:[%s421 + $0x8] sm:$0xff]
        %v424 = vld [vmem:[%s421 + $0x10] sm:$0xff]
        %v425 = vld [vmem:[%s421 + $0x18] sm:$0xf]
        %vm426 = vcmask 228352
        %v428 = vsel %vm426, %v418, 0
        %v431 = vsel %vm426, %v419, 0
        %v434 = vsel %vm426, %v420, 0
        %vm436 = vcmask 1043456
        %v438 = vsel %vm436, %v425, 0
        %440 = vmatpush.msra.mxu0 0.0
        %441 = vmatpush.msra.mxu0 0.0
        %442 = vmatpush.msra.mxu0 0.0
        %443 = vmatpush.msra.mxu0 0.0
        %444 = vmatpush.msra.mxu0 0.0
        %445 = vmatpush.msra.mxu0 0.0
        %446 = vmatpush.msra.mxu0 0.0
        %447 = vmatpush.msra.mxu0 0.0
        %448 = vmatpush.msra.mxu0 0.0
        %449 = vmatpush.msra.mxu0 0.0
        %450 = vmatpush.msra.mxu0 0.0
        %451 = vmatpush.msra.mxu0 0.0
        %452 = vmatpush.msra.mxu0 %v438
        %453 = vmatpush.msra.mxu0 %v424
        %454 = vmatpush.msra.mxu0 %v423
        %455 = vmatpush.msra.mxu0 %v422
        %456 = vmatmul.f32.gmra.mxu0 %v428
        %v457 = vpop.f32.mrf.mxu0
        %v458 = vadd.f32 0.0, %v457
        %459 = vmatmul.f32.gmra.mxu0 %v431
        %v460 = vpop.f32.mrf.mxu0
        %v461 = vadd.f32 0.0, %v460
        %462 = vmatmul.f32.gmra.mxu0 %v434
        %v463 = vpop.f32.mrf.mxu0
        %v464 = vadd.f32 0.0, %v463
        %465 = vdwg.mxu0
        %v467 = vsel %vm426, %v411, 0
        %v470 = vsel %vm426, %v412, 0
        %v473 = vsel %vm426, %v413, 0
        %v476 = vsel %vm436, %v417, 0
        %478 = vmatpush.msra.mxu0 0.0
        %479 = vmatpush.msra.mxu0 0.0
        %480 = vmatpush.msra.mxu0 0.0
        %481 = vmatpush.msra.mxu0 0.0
        %482 = vmatpush.msra.mxu0 0.0
        %483 = vmatpush.msra.mxu0 0.0
        %484 = vmatpush.msra.mxu0 0.0
        %485 = vmatpush.msra.mxu0 0.0
        %486 = vmatpush.msra.mxu0 0.0
        %487 = vmatpush.msra.mxu0 0.0
        %488 = vmatpush.msra.mxu0 0.0
        %489 = vmatpush.msra.mxu0 0.0
        %490 = vmatpush.msra.mxu0 %v476
        %491 = vmatpush.msra.mxu0 %v416
        %492 = vmatpush.msra.mxu0 %v415
        %493 = vmatpush.msra.mxu0 %v414
        %494 = vmatmul.f32.gmra.mxu0 %v467
        %v495 = vpop.f32.mrf.mxu0
        %v496 = vadd.f32 %v458, %v495
        %497 = vmatmul.f32.gmra.mxu0 %v470
        %v498 = vpop.f32.mrf.mxu0
        %v499 = vadd.f32 %v461, %v498
        %500 = vmatmul.f32.gmra.mxu0 %v473
        %v501 = vpop.f32.mrf.mxu0
        %v502 = vadd.f32 %v464, %v501
        %503 = vdwg.mxu0
        %v504 = vld [vmem:[%s410 + $0x2] sm:$0xff]
        %v505 = vld [vmem:[%s410 + $0xa] sm:$0xff]
        %v506 = vld [vmem:[%s410 + $0x12] sm:$0xff]
        %s507 = scalar_lea.vmem %s1, 64
        %v508 = vld [vmem:[%s507] sm:$0xff]
        %v509 = vld [vmem:[%s507 + $0x8] sm:$0xff]
        %v510 = vld [vmem:[%s507 + $0x10] sm:$0xff]
        %v511 = vld [vmem:[%s507 + $0x18] sm:$0xf]
        %v513 = vsel %vm426, %v504, 0
        %v516 = vsel %vm426, %v505, 0
        %v519 = vsel %vm426, %v506, 0
        %v522 = vsel %vm436, %v511, 0
        %524 = vmatpush.msra.mxu0 0.0
        %525 = vmatpush.msra.mxu0 0.0
        %526 = vmatpush.msra.mxu0 0.0
        %527 = vmatpush.msra.mxu0 0.0
        %528 = vmatpush.msra.mxu0 0.0
        %529 = vmatpush.msra.mxu0 0.0
        %530 = vmatpush.msra.mxu0 0.0
        %531 = vmatpush.msra.mxu0 0.0
        %532 = vmatpush.msra.mxu0 0.0
        %533 = vmatpush.msra.mxu0 0.0
        %534 = vmatpush.msra.mxu0 0.0
        %535 = vmatpush.msra.mxu0 0.0
        %536 = vmatpush.msra.mxu0 %v522
        %537 = vmatpush.msra.mxu0 %v510
        %538 = vmatpush.msra.mxu0 %v509
        %539 = vmatpush.msra.mxu0 %v508
        %540 = vmatmul.f32.gmra.mxu0 %v513
        %v541 = vpop.f32.mrf.mxu0
        %v542 = vadd.f32 0.0, %v541
        %543 = vmatmul.f32.gmra.mxu0 %v516
        %v544 = vpop.f32.mrf.mxu0
        %v545 = vadd.f32 0.0, %v544
        %546 = vmatmul.f32.gmra.mxu0 %v519
        %v547 = vpop.f32.mrf.mxu0
        %v548 = vadd.f32 0.0, %v547
        %549 = vdwg.mxu0
        %v550 = vadd.f32 %v496, %v542
        %v551 = vadd.f32 %v499, %v545
        %v552 = vadd.f32 %v502, %v548
        %v553 = vld [vmem:[%s410 + $0x3] sm:$0xff]
        %v554 = vld [vmem:[%s410 + $0xb] sm:$0xff]
        %v555 = vld [vmem:[%s410 + $0x13] sm:$0xff]
        %s556 = scalar_lea.vmem %s1, 96
        %v557 = vld [vmem:[%s556] sm:$0xff]
        %v558 = vld [vmem:[%s556 + $0x8] sm:$0xff]
        %v559 = vld [vmem:[%s556 + $0x10] sm:$0xff]
        %v560 = vld [vmem:[%s556 + $0x18] sm:$0xf]
        %v562 = vsel %vm426, %v553, 0
        %v565 = vsel %vm426, %v554, 0
        %v568 = vsel %vm426, %v555, 0
        %v571 = vsel %vm436, %v560, 0
        %573 = vmatpush.msra.mxu0 0.0
        %574 = vmatpush.msra.mxu0 0.0
        %575 = vmatpush.msra.mxu0 0.0
        %576 = vmatpush.msra.mxu0 0.0
        %577 = vmatpush.msra.mxu0 0.0
        %578 = vmatpush.msra.mxu0 0.0
        %579 = vmatpush.msra.mxu0 0.0
        %580 = vmatpush.msra.mxu0 0.0
        %581 = vmatpush.msra.mxu0 0.0
        %582 = vmatpush.msra.mxu0 0.0
        %583 = vmatpush.msra.mxu0 0.0
        %584 = vmatpush.msra.mxu0 0.0
        %585 = vmatpush.msra.mxu0 %v571
        %586 = vmatpush.msra.mxu0 %v559
        %587 = vmatpush.msra.mxu0 %v558
        %588 = vmatpush.msra.mxu0 %v557
        %589 = vmatmul.f32.gmra.mxu0 %v562
        %v590 = vpop.f32.mrf.mxu0
        %v591 = vadd.f32 0.0, %v590
        %592 = vmatmul.f32.gmra.mxu0 %v565
        %v593 = vpop.f32.mrf.mxu0
        %v594 = vadd.f32 0.0, %v593
        %595 = vmatmul.f32.gmra.mxu0 %v568
        %v596 = vpop.f32.mrf.mxu0
        %v597 = vadd.f32 0.0, %v596
        %598 = vdwg.mxu0
        %v599 = vadd.f32 %v550, %v591
        %v600 = vadd.f32 %v551, %v594
        %v601 = vadd.f32 %v552, %v597
        %v602 = vld [vmem:[%s410 + $0x4] sm:$0xff]
        %v603 = vld [vmem:[%s410 + $0xc] sm:$0xff]
        %v604 = vld [vmem:[%s410 + $0x14] sm:$0xff]
        %s605 = scalar_lea.vmem %s1, 128
        %v606 = vld [vmem:[%s605] sm:$0xff]
        %v607 = vld [vmem:[%s605 + $0x8] sm:$0xff]
        %v608 = vld [vmem:[%s605 + $0x10] sm:$0xff]
        %v609 = vld [vmem:[%s605 + $0x18] sm:$0xf]
        %v611 = vsel %vm426, %v602, 0
        %v614 = vsel %vm426, %v603, 0
        %v617 = vsel %vm426, %v604, 0
        %v620 = vsel %vm436, %v609, 0
        %622 = vmatpush.msra.mxu0 0.0
        %623 = vmatpush.msra.mxu0 0.0
        %624 = vmatpush.msra.mxu0 0.0
        %625 = vmatpush.msra.mxu0 0.0
        %626 = vmatpush.msra.mxu0 0.0
        %627 = vmatpush.msra.mxu0 0.0
        %628 = vmatpush.msra.mxu0 0.0
        %629 = vmatpush.msra.mxu0 0.0
        %630 = vmatpush.msra.mxu0 0.0
        %631 = vmatpush.msra.mxu0 0.0
        %632 = vmatpush.msra.mxu0 0.0
        %633 = vmatpush.msra.mxu0 0.0
        %634 = vmatpush.msra.mxu0 %v620
        %635 = vmatpush.msra.mxu0 %v608
        %636 = vmatpush.msra.mxu0 %v607
        %637 = vmatpush.msra.mxu0 %v606
        %638 = vmatmul.f32.gmra.mxu0 %v611
        %v639 = vpop.f32.mrf.mxu0
        %v640 = vadd.f32 0.0, %v639
        %641 = vmatmul.f32.gmra.mxu0 %v614
        %v642 = vpop.f32.mrf.mxu0
        %v643 = vadd.f32 0.0, %v642
        %644 = vmatmul.f32.gmra.mxu0 %v617
        %v645 = vpop.f32.mrf.mxu0
        %v646 = vadd.f32 0.0, %v645
        %647 = vdwg.mxu0
        %v648 = vadd.f32 %v599, %v640
        %v649 = vadd.f32 %v600, %v643
        %v650 = vadd.f32 %v601, %v646
        %s651 = scalar_lea.vmem %s1, 160
        %v652 = vld [vmem:[%s651] sm:$0xff]
        %v653 = vld [vmem:[%s651 + $0x8] sm:$0xff]
        %v654 = vld [vmem:[%s651 + $0x10] sm:$0xff]
        %v655 = vld [vmem:[%s651 + $0x18] sm:$0xf]
        %s656 = scalar_lea.vmem %s1, 192
        %v657 = vld [vmem:[%s656] sm:$0xff]
        %v658 = vld [vmem:[%s656 + $0x8] sm:$0xff]
        %v659 = vld [vmem:[%s656 + $0x10] sm:$0xff]
        %v660 = vld [vmem:[%s656 + $0x18] sm:$0xf]
        %v662 = vsel %vm436, %v660, 0
        %664 = vmatpush.msra.mxu0 0.0
        %665 = vmatpush.msra.mxu0 0.0
        %666 = vmatpush.msra.mxu0 0.0
        %667 = vmatpush.msra.mxu0 0.0
        %668 = vmatpush.msra.mxu0 0.0
        %669 = vmatpush.msra.mxu0 0.0
        %670 = vmatpush.msra.mxu0 0.0
        %671 = vmatpush.msra.mxu0 0.0
        %672 = vmatpush.msra.mxu0 0.0
        %673 = vmatpush.msra.mxu0 0.0
        %674 = vmatpush.msra.mxu0 0.0
        %675 = vmatpush.msra.mxu0 0.0
        %676 = vmatpush.msra.mxu0 %v662
        %677 = vmatpush.msra.mxu0 %v659
        %678 = vmatpush.msra.mxu0 %v658
        %679 = vmatpush.msra.mxu0 %v657
        %680 = vmatmul.f32.gmra.mxu0 %v428
        %v681 = vpop.f32.mrf.mxu0
        %v682 = vadd.f32 0.0, %v681
        %683 = vmatmul.f32.gmra.mxu0 %v431
        %v684 = vpop.f32.mrf.mxu0
        %v685 = vadd.f32 0.0, %v684
        %686 = vmatmul.f32.gmra.mxu0 %v434
        %v687 = vpop.f32.mrf.mxu0
        %v688 = vadd.f32 0.0, %v687
        %689 = vdwg.mxu0
        %v691 = vsel %vm436, %v655, 0
        %693 = vmatpush.msra.mxu0 0.0
        %694 = vmatpush.msra.mxu0 0.0
        %695 = vmatpush.msra.mxu0 0.0
        %696 = vmatpush.msra.mxu0 0.0
        %697 = vmatpush.msra.mxu0 0.0
        %698 = vmatpush.msra.mxu0 0.0
        %699 = vmatpush.msra.mxu0 0.0
        %700 = vmatpush.msra.mxu0 0.0
        %701 = vmatpush.msra.mxu0 0.0
        %702 = vmatpush.msra.mxu0 0.0
        %703 = vmatpush.msra.mxu0 0.0
        %704 = vmatpush.msra.mxu0 0.0
        %705 = vmatpush.msra.mxu0 %v691
        %706 = vmatpush.msra.mxu0 %v654
        %707 = vmatpush.msra.mxu0 %v653
        %708 = vmatpush.msra.mxu0 %v652
        %709 = vmatmul.f32.gmra.mxu0 %v467
        %v710 = vpop.f32.mrf.mxu0
        %v711 = vadd.f32 %v682, %v710
        %712 = vmatmul.f32.gmra.mxu0 %v470
        %v713 = vpop.f32.mrf.mxu0
        %v714 = vadd.f32 %v685, %v713
        %715 = vmatmul.f32.gmra.mxu0 %v473
        %v716 = vpop.f32.mrf.mxu0
        %v717 = vadd.f32 %v688, %v716
        %718 = vdwg.mxu0
        %s719 = scalar_lea.vmem %s1, 224
        %v720 = vld [vmem:[%s719] sm:$0xff]
        %v721 = vld [vmem:[%s719 + $0x8] sm:$0xff]
        %v722 = vld [vmem:[%s719 + $0x10] sm:$0xff]
        %v723 = vld [vmem:[%s719 + $0x18] sm:$0xf]
        %v725 = vsel %vm436, %v723, 0
        %727 = vmatpush.msra.mxu0 0.0
        %728 = vmatpush.msra.mxu0 0.0
        %729 = vmatpush.msra.mxu0 0.0
        %730 = vmatpush.msra.mxu0 0.0
        %731 = vmatpush.msra.mxu0 0.0
        %732 = vmatpush.msra.mxu0 0.0
        %733 = vmatpush.msra.mxu0 0.0
        %734 = vmatpush.msra.mxu0 0.0
        %735 = vmatpush.msra.mxu0 0.0
        %736 = vmatpush.msra.mxu0 0.0
        %737 = vmatpush.msra.mxu0 0.0
        %738 = vmatpush.msra.mxu0 0.0
        %739 = vmatpush.msra.mxu0 %v725
        %740 = vmatpush.msra.mxu0 %v722
        %741 = vmatpush.msra.mxu0 %v721
        %742 = vmatpush.msra.mxu0 %v720
        %743 = vmatmul.f32.gmra.mxu0 %v513
        %v744 = vpop.f32.mrf.mxu0
        %v745 = vadd.f32 0.0, %v744
        %746 = vmatmul.f32.gmra.mxu0 %v516
        %v747 = vpop.f32.mrf.mxu0
        %v748 = vadd.f32 0.0, %v747
        %749 = vmatmul.f32.gmra.mxu0 %v519
        %v750 = vpop.f32.mrf.mxu0
        %v751 = vadd.f32 0.0, %v750
        %752 = vdwg.mxu0
        %v753 = vadd.f32 %v711, %v745
        %v754 = vadd.f32 %v714, %v748
        %v755 = vadd.f32 %v717, %v751
        %s756 = scalar_lea.vmem %s1, 256
        %v757 = vld [vmem:[%s756] sm:$0xff]
        %v758 = vld [vmem:[%s756 + $0x8] sm:$0xff]
        %v759 = vld [vmem:[%s756 + $0x10] sm:$0xff]
        %v760 = vld [vmem:[%s756 + $0x18] sm:$0xf]
        %v762 = vsel %vm436, %v760, 0
        %764 = vmatpush.msra.mxu0 0.0
        %765 = vmatpush.msra.mxu0 0.0
        %766 = vmatpush.msra.mxu0 0.0
        %767 = vmatpush.msra.mxu0 0.0
        %768 = vmatpush.msra.mxu0 0.0
        %769 = vmatpush.msra.mxu0 0.0
        %770 = vmatpush.msra.mxu0 0.0
        %771 = vmatpush.msra.mxu0 0.0
        %772 = vmatpush.msra.mxu0 0.0
        %773 = vmatpush.msra.mxu0 0.0
        %774 = vmatpush.msra.mxu0 0.0
        %775 = vmatpush.msra.mxu0 0.0
        %776 = vmatpush.msra.mxu0 %v762
        %777 = vmatpush.msra.mxu0 %v759
        %778 = vmatpush.msra.mxu0 %v758
        %779 = vmatpush.msra.mxu0 %v757
        %780 = vmatmul.f32.gmra.mxu0 %v562
        %v781 = vpop.f32.mrf.mxu0
        %v782 = vadd.f32 0.0, %v781
        %783 = vmatmul.f32.gmra.mxu0 %v565
        %v784 = vpop.f32.mrf.mxu0
        %v785 = vadd.f32 0.0, %v784
        %786 = vmatmul.f32.gmra.mxu0 %v568
        %v787 = vpop.f32.mrf.mxu0
        %v788 = vadd.f32 0.0, %v787
        %789 = vdwg.mxu0
        %v790 = vadd.f32 %v753, %v782
        %v791 = vadd.f32 %v754, %v785
        %v792 = vadd.f32 %v755, %v788
        %s793 = scalar_lea.vmem %s1, 288
        %v794 = vld [vmem:[%s793] sm:$0xff]
        %v795 = vld [vmem:[%s793 + $0x8] sm:$0xff]
        %v796 = vld [vmem:[%s793 + $0x10] sm:$0xff]
        %v797 = vld [vmem:[%s793 + $0x18] sm:$0xf]
        %v799 = vsel %vm436, %v797, 0
        %801 = vmatpush.msra.mxu0 0.0
        %802 = vmatpush.msra.mxu0 0.0
        %803 = vmatpush.msra.mxu0 0.0
        %804 = vmatpush.msra.mxu0 0.0
        %805 = vmatpush.msra.mxu0 0.0
        %806 = vmatpush.msra.mxu0 0.0
        %807 = vmatpush.msra.mxu0 0.0
        %808 = vmatpush.msra.mxu0 0.0
        %809 = vmatpush.msra.mxu0 0.0
        %810 = vmatpush.msra.mxu0 0.0
        %811 = vmatpush.msra.mxu0 0.0
        %812 = vmatpush.msra.mxu0 0.0
        %813 = vmatpush.msra.mxu0 %v799
        %814 = vmatpush.msra.mxu0 %v796
        %815 = vmatpush.msra.mxu0 %v795
        %816 = vmatpush.msra.mxu0 %v794
        %817 = vmatmul.f32.gmra.mxu0 %v611
        %v818 = vpop.f32.mrf.mxu0
        %v819 = vadd.f32 0.0, %v818
        %820 = vmatmul.f32.gmra.mxu0 %v614
        %v821 = vpop.f32.mrf.mxu0
        %v822 = vadd.f32 0.0, %v821
        %823 = vmatmul.f32.gmra.mxu0 %v617
        %v824 = vpop.f32.mrf.mxu0
        %v825 = vadd.f32 0.0, %v824
        %826 = vdwg.mxu0
        %v827 = vadd.f32 %v790, %v819
        %v828 = vadd.f32 %v791, %v822
        %v829 = vadd.f32 %v792, %v825
        %v830 = vmax.f32 %v648, %v827
        %v831 = vmax.f32 %v649, %v828
        %v832 = vmax.f32 %v650, %v829
        %v833 = vld [vmem:[%s2] sm:$0xff]
        %v834 = vld [vmem:[%s2 + $0x8] sm:$0xff]
        %vm835 = vcmask 195584
        %v837 = vsel %vm835, %v833, 0
        %v840 = vsel %vm835, %v834, 0
        %842 = vmatpush.msra.mxu0 0.0
        %843 = vmatpush.msra.mxu0 0.0
        %844 = vmatpush.msra.mxu0 0.0
        %845 = vmatpush.msra.mxu0 0.0
        %846 = vmatpush.msra.mxu0 0.0
        %847 = vmatpush.msra.mxu0 0.0
        %848 = vmatpush.msra.mxu0 0.0
        %849 = vmatpush.msra.mxu0 0.0
        %850 = vmatpush.msra.mxu0 0.0
        %851 = vmatpush.msra.mxu0 0.0
        %852 = vmatpush.msra.mxu0 0.0
        %853 = vmatpush.msra.mxu0 0.0
        %854 = vmatpush.msra.mxu0 0.0
        %855 = vmatpush.msra.mxu0 %v832
        %856 = vmatpush.msra.mxu0 %v831
        %857 = vmatpush.msra.mxu0 %v830
        %858 = vmatmul.f32.gmra.mxu0 %v837
        %v859 = vpop.f32.mrf.mxu0
        %v860 = vadd.f32 0.0, %v859
        %861 = vmatmul.f32.gmra.mxu0 %v840
        %v862 = vpop.f32.mrf.mxu0
        %v863 = vadd.f32 0.0, %v862
        %864 = vdwg.mxu0
        %v865 = vld [vmem:[%s3] sm:$0xff]
        %v866 = vld [vmem:[%s3 + $0x8] sm:$0xff]
        %v868 = vsel %vm835, %v865, 0
        %v871 = vsel %vm835, %v866, 0
        %873 = vmatpush.msra.mxu0 0.0
        %874 = vmatpush.msra.mxu0 0.0
        %875 = vmatpush.msra.mxu0 0.0
        %876 = vmatpush.msra.mxu0 0.0
        %877 = vmatpush.msra.mxu0 0.0
        %878 = vmatpush.msra.mxu0 0.0
        %879 = vmatpush.msra.mxu0 0.0
        %880 = vmatpush.msra.mxu0 0.0
        %881 = vmatpush.msra.mxu0 0.0
        %882 = vmatpush.msra.mxu0 0.0
        %883 = vmatpush.msra.mxu0 0.0
        %884 = vmatpush.msra.mxu0 0.0
        %885 = vmatpush.msra.mxu0 0.0
        %886 = vmatpush.msra.mxu0 %v832
        %887 = vmatpush.msra.mxu0 %v831
        %888 = vmatpush.msra.mxu0 %v830
        %889 = vmatmul.f32.gmra.mxu0 %v868
        %v890 = vpop.f32.mrf.mxu0
        %v891 = vadd.f32 0.0, %v890
        %892 = vmatmul.f32.gmra.mxu0 %v871
        %v893 = vpop.f32.mrf.mxu0
        %v894 = vadd.f32 0.0, %v893
        %895 = vdwg.mxu0
        %v896 = vmax.f32 %v860, %v891
        %v897 = vmax.f32 %v863, %v894
        %v898 = vmax.f32 %v896, 0.0
        %v899 = vmax.f32 %v897, 0.0
        %vm900 = vcmask 982016
        %901 = vst.msk [vmem:[#allocation2] sm:$0xff] %vm900, %v898
        %902 = vst.msk [vmem:[#allocation2 + $0x8] sm:$0xff] %vm900, %v899
        %v903 = vld [vmem:[#allocation2] sm:$0xff]
        %v904 = vld [vmem:[%s4] sm:$0xff]
        %v905 = vld [vmem:[%s4 + $0x8] sm:$0xff]
        %v906 = vld [vmem:[%s4 + $0x10] sm:$0xff]
        %v907 = vld [vmem:[%s4 + $0x18] sm:$0xff]
        %v908 = vld [vmem:[%s4 + $0x20] sm:$0xff]
        %v909 = vld [vmem:[%s4 + $0x28] sm:$0xff]
        %v910 = vld [vmem:[%s4 + $0x30] sm:$0xff]
        %v911 = vld [vmem:[%s4 + $0x38] sm:$0xff]
        %v912 = vld [vmem:[%s4 + $0x40] sm:$0xff]
        %v913 = vld [vmem:[%s4 + $0x48] sm:$0xff]
        %v914 = vld [vmem:[%s4 + $0x50] sm:$0xff]
        %v915 = vld [vmem:[%s4 + $0x58] sm:$0xff]
        %v916 = vld [vmem:[%s4 + $0x60] sm:$0xff]
        %v917 = vld [vmem:[%s4 + $0x68] sm:$0xff]
        %v918 = vld [vmem:[%s4 + $0x70] sm:$0xff]
        %v919 = vld [vmem:[#allocation2 + $0x1] sm:$0xff]
        %s920 = scalar_lea.vmem %s4, 120
        %v921 = vld [vmem:[%s920] sm:$0xff]
        %v922 = vld [vmem:[%s920 + $0x8] sm:$0xff]
        %v923 = vld [vmem:[%s920 + $0x10] sm:$0xff]
        %v924 = vld [vmem:[%s920 + $0x18] sm:$0xff]
        %v925 = vld [vmem:[%s920 + $0x20] sm:$0xff]
        %v926 = vld [vmem:[%s920 + $0x28] sm:$0xff]
        %v927 = vld [vmem:[%s920 + $0x30] sm:$0xff]
        %v928 = vld [vmem:[%s920 + $0x38] sm:$0xff]
        %v929 = vld [vmem:[%s920 + $0x40] sm:$0xff]
        %v930 = vld [vmem:[%s920 + $0x48] sm:$0xff]
        %v931 = vld [vmem:[%s920 + $0x50] sm:$0xff]
        %v932 = vld [vmem:[%s920 + $0x58] sm:$0xff]
        %v933 = vld [vmem:[%s920 + $0x60] sm:$0xff]
        %v934 = vld [vmem:[%s920 + $0x68] sm:$0xff]
        %v935 = vld [vmem:[%s920 + $0x70] sm:$0xff]
        %v937 = vsel %vm900, %v919, 0
        %939 = vmatpush.msra.mxu0 0.0
        %940 = vmatpush.msra.mxu0 %v935
        %941 = vmatpush.msra.mxu0 %v934
        %942 = vmatpush.msra.mxu0 %v933
        %943 = vmatpush.msra.mxu0 %v932
        %944 = vmatpush.msra.mxu0 %v931
        %945 = vmatpush.msra.mxu0 %v930
        %946 = vmatpush.msra.mxu0 %v929
        %947 = vmatpush.msra.mxu0 %v928
        %948 = vmatpush.msra.mxu0 %v927
        %949 = vmatpush.msra.mxu0 %v926
        %950 = vmatpush.msra.mxu0 %v925
        %951 = vmatpush.msra.mxu0 %v924
        %952 = vmatpush.msra.mxu0 %v923
        %953 = vmatpush.msra.mxu0 %v922
        %954 = vmatpush.msra.mxu0 %v921
        %955 = vmatmul.f32.gmra.mxu0 %v937
        %v956 = vpop.f32.mrf.mxu0
        %v957 = vadd.f32 0.0, %v956
        %958 = vdwg.mxu0
        %v960 = vsel %vm900, %v903, 0
        %962 = vmatpush.msra.mxu0 0.0
        %963 = vmatpush.msra.mxu0 %v918
        %964 = vmatpush.msra.mxu0 %v917
        %965 = vmatpush.msra.mxu0 %v916
        %966 = vmatpush.msra.mxu0 %v915
        %967 = vmatpush.msra.mxu0 %v914
        %968 = vmatpush.msra.mxu0 %v913
        %969 = vmatpush.msra.mxu0 %v912
        %970 = vmatpush.msra.mxu0 %v911
        %971 = vmatpush.msra.mxu0 %v910
        %972 = vmatpush.msra.mxu0 %v909
        %973 = vmatpush.msra.mxu0 %v908
        %974 = vmatpush.msra.mxu0 %v907
        %975 = vmatpush.msra.mxu0 %v906
        %976 = vmatpush.msra.mxu0 %v905
        %977 = vmatpush.msra.mxu0 %v904
        %978 = vmatmul.f32.gmra.mxu0 %v960
        %v979 = vpop.f32.mrf.mxu0
        %v980 = vadd.f32 %v957, %v979
        %981 = vdwg.mxu0
        %v982 = vld [vmem:[#allocation2 + $0x2] sm:$0xff]
        %s983 = scalar_lea.vmem %s4, 240
        %v984 = vld [vmem:[%s983] sm:$0xff]
        %v985 = vld [vmem:[%s983 + $0x8] sm:$0xff]
        %v986 = vld [vmem:[%s983 + $0x10] sm:$0xff]
        %v987 = vld [vmem:[%s983 + $0x18] sm:$0xff]
        %v988 = vld [vmem:[%s983 + $0x20] sm:$0xff]
        %v989 = vld [vmem:[%s983 + $0x28] sm:$0xff]
        %v990 = vld [vmem:[%s983 + $0x30] sm:$0xff]
        %v991 = vld [vmem:[%s983 + $0x38] sm:$0xff]
        %v992 = vld [vmem:[%s983 + $0x40] sm:$0xff]
        %v993 = vld [vmem:[%s983 + $0x48] sm:$0xff]
        %v994 = vld [vmem:[%s983 + $0x50] sm:$0xff]
        %v995 = vld [vmem:[%s983 + $0x58] sm:$0xff]
        %v996 = vld [vmem:[%s983 + $0x60] sm:$0xff]
        %v997 = vld [vmem:[%s983 + $0x68] sm:$0xff]
        %v998 = vld [vmem:[%s983 + $0x70] sm:$0xff]
        %v1000 = vsel %vm900, %v982, 0
        %1002 = vmatpush.msra.mxu0 0.0
        %1003 = vmatpush.msra.mxu0 %v998
        %1004 = vmatpush.msra.mxu0 %v997
        %1005 = vmatpush.msra.mxu0 %v996
        %1006 = vmatpush.msra.mxu0 %v995
        %1007 = vmatpush.msra.mxu0 %v994
        %1008 = vmatpush.msra.mxu0 %v993
        %1009 = vmatpush.msra.mxu0 %v992
        %1010 = vmatpush.msra.mxu0 %v991
        %1011 = vmatpush.msra.mxu0 %v990
        %1012 = vmatpush.msra.mxu0 %v989
        %1013 = vmatpush.msra.mxu0 %v988
        %1014 = vmatpush.msra.mxu0 %v987
        %1015 = vmatpush.msra.mxu0 %v986
        %1016 = vmatpush.msra.mxu0 %v985
        %1017 = vmatpush.msra.mxu0 %v984
        %1018 = vmatmul.f32.gmra.mxu0 %v1000
        %v1019 = vpop.f32.mrf.mxu0
        %v1020 = vadd.f32 0.0, %v1019
        %1021 = vdwg.mxu0
        %v1022 = vadd.f32 %v980, %v1020
        %v1023 = vld [vmem:[#allocation2 + $0x3] sm:$0xff]
        %s1024 = scalar_lea.vmem %s4, 360
        %v1025 = vld [vmem:[%s1024] sm:$0xff]
        %v1026 = vld [vmem:[%s1024 + $0x8] sm:$0xff]
        %v1027 = vld [vmem:[%s1024 + $0x10] sm:$0xff]
        %v1028 = vld [vmem:[%s1024 + $0x18] sm:$0xff]
        %v1029 = vld [vmem:[%s1024 + $0x20] sm:$0xff]
        %v1030 = vld [vmem:[%s1024 + $0x28] sm:$0xff]
        %v1031 = vld [vmem:[%s1024 + $0x30] sm:$0xff]
        %v1032 = vld [vmem:[%s1024 + $0x38] sm:$0xff]
        %v1033 = vld [vmem:[%s1024 + $0x40] sm:$0xff]
        %v1034 = vld [vmem:[%s1024 + $0x48] sm:$0xff]
        %v1035 = vld [vmem:[%s1024 + $0x50] sm:$0xff]
        %v1036 = vld [vmem:[%s1024 + $0x58] sm:$0xff]
        %v1037 = vld [vmem:[%s1024 + $0x60] sm:$0xff]
        %v1038 = vld [vmem:[%s1024 + $0x68] sm:$0xff]
        %v1039 = vld [vmem:[%s1024 + $0x70] sm:$0xff]
        %v1041 = vsel %vm900, %v1023, 0
        %1043 = vmatpush.msra.mxu0 0.0
        %1044 = vmatpush.msra.mxu0 %v1039
        %1045 = vmatpush.msra.mxu0 %v1038
        %1046 = vmatpush.msra.mxu0 %v1037
        %1047 = vmatpush.msra.mxu0 %v1036
        %1048 = vmatpush.msra.mxu0 %v1035
        %1049 = vmatpush.msra.mxu0 %v1034
        %1050 = vmatpush.msra.mxu0 %v1033
        %1051 = vmatpush.msra.mxu0 %v1032
        %1052 = vmatpush.msra.mxu0 %v1031
        %1053 = vmatpush.msra.mxu0 %v1030
        %1054 = vmatpush.msra.mxu0 %v1029
        %1055 = vmatpush.msra.mxu0 %v1028
        %1056 = vmatpush.msra.mxu0 %v1027
        %1057 = vmatpush.msra.mxu0 %v1026
        %1058 = vmatpush.msra.mxu0 %v1025
        %1059 = vmatmul.f32.gmra.mxu0 %v1041
        %v1060 = vpop.f32.mrf.mxu0
        %v1061 = vadd.f32 0.0, %v1060
        %1062 = vdwg.mxu0
        %v1063 = vadd.f32 %v1022, %v1061
        %v1064 = vld [vmem:[#allocation2 + $0x4] sm:$0xff]
        %s1065 = scalar_lea.vmem %s4, 480
        %v1066 = vld [vmem:[%s1065] sm:$0xff]
        %v1067 = vld [vmem:[%s1065 + $0x8] sm:$0xff]
        %v1068 = vld [vmem:[%s1065 + $0x10] sm:$0xff]
        %v1069 = vld [vmem:[%s1065 + $0x18] sm:$0xff]
        %v1070 = vld [vmem:[%s1065 + $0x20] sm:$0xff]
        %v1071 = vld [vmem:[%s1065 + $0x28] sm:$0xff]
        %v1072 = vld [vmem:[%s1065 + $0x30] sm:$0xff]
        %v1073 = vld [vmem:[%s1065 + $0x38] sm:$0xff]
        %v1074 = vld [vmem:[%s1065 + $0x40] sm:$0xff]
        %v1075 = vld [vmem:[%s1065 + $0x48] sm:$0xff]
        %v1076 = vld [vmem:[%s1065 + $0x50] sm:$0xff]
        %v1077 = vld [vmem:[%s1065 + $0x58] sm:$0xff]
        %v1078 = vld [vmem:[%s1065 + $0x60] sm:$0xff]
        %v1079 = vld [vmem:[%s1065 + $0x68] sm:$0xff]
        %v1080 = vld [vmem:[%s1065 + $0x70] sm:$0xff]
        %v1082 = vsel %vm900, %v1064, 0
        %1084 = vmatpush.msra.mxu0 0.0
        %1085 = vmatpush.msra.mxu0 %v1080
        %1086 = vmatpush.msra.mxu0 %v1079
        %1087 = vmatpush.msra.mxu0 %v1078
        %1088 = vmatpush.msra.mxu0 %v1077
        %1089 = vmatpush.msra.mxu0 %v1076
        %1090 = vmatpush.msra.mxu0 %v1075
        %1091 = vmatpush.msra.mxu0 %v1074
        %1092 = vmatpush.msra.mxu0 %v1073
        %1093 = vmatpush.msra.mxu0 %v1072
        %1094 = vmatpush.msra.mxu0 %v1071
        %1095 = vmatpush.msra.mxu0 %v1070
        %1096 = vmatpush.msra.mxu0 %v1069
        %1097 = vmatpush.msra.mxu0 %v1068
        %1098 = vmatpush.msra.mxu0 %v1067
        %1099 = vmatpush.msra.mxu0 %v1066
        %1100 = vmatmul.f32.gmra.mxu0 %v1082
        %v1101 = vpop.f32.mrf.mxu0
        %v1102 = vadd.f32 0.0, %v1101
        %1103 = vdwg.mxu0
        %v1104 = vadd.f32 %v1063, %v1102
        %s1105 = scalar_lea.vmem %s4, 600
        %v1106 = vld [vmem:[%s1105] sm:$0xff]
        %v1107 = vld [vmem:[%s1105 + $0x8] sm:$0xff]
        %v1108 = vld [vmem:[%s1105 + $0x10] sm:$0xff]
        %v1109 = vld [vmem:[%s1105 + $0x18] sm:$0xff]
        %v1110 = vld [vmem:[%s1105 + $0x20] sm:$0xff]
        %v1111 = vld [vmem:[%s1105 + $0x28] sm:$0xff]
        %v1112 = vld [vmem:[%s1105 + $0x30] sm:$0xff]
        %v1113 = vld [vmem:[%s1105 + $0x38] sm:$0xff]
        %v1114 = vld [vmem:[%s1105 + $0x40] sm:$0xff]
        %v1115 = vld [vmem:[%s1105 + $0x48] sm:$0xff]
        %v1116 = vld [vmem:[%s1105 + $0x50] sm:$0xff]
        %v1117 = vld [vmem:[%s1105 + $0x58] sm:$0xff]
        %v1118 = vld [vmem:[%s1105 + $0x60] sm:$0xff]
        %v1119 = vld [vmem:[%s1105 + $0x68] sm:$0xff]
        %v1120 = vld [vmem:[%s1105 + $0x70] sm:$0xff]
        %s1121 = scalar_lea.vmem %s4, 720
        %v1122 = vld [vmem:[%s1121] sm:$0xff]
        %v1123 = vld [vmem:[%s1121 + $0x8] sm:$0xff]
        %v1124 = vld [vmem:[%s1121 + $0x10] sm:$0xff]
        %v1125 = vld [vmem:[%s1121 + $0x18] sm:$0xff]
        %v1126 = vld [vmem:[%s1121 + $0x20] sm:$0xff]
        %v1127 = vld [vmem:[%s1121 + $0x28] sm:$0xff]
        %v1128 = vld [vmem:[%s1121 + $0x30] sm:$0xff]
        %v1129 = vld [vmem:[%s1121 + $0x38] sm:$0xff]
        %v1130 = vld [vmem:[%s1121 + $0x40] sm:$0xff]
        %v1131 = vld [vmem:[%s1121 + $0x48] sm:$0xff]
        %v1132 = vld [vmem:[%s1121 + $0x50] sm:$0xff]
        %v1133 = vld [vmem:[%s1121 + $0x58] sm:$0xff]
        %v1134 = vld [vmem:[%s1121 + $0x60] sm:$0xff]
        %v1135 = vld [vmem:[%s1121 + $0x68] sm:$0xff]
        %v1136 = vld [vmem:[%s1121 + $0x70] sm:$0xff]
        %1137 = vmatpush.msra.mxu0 0.0
        %1138 = vmatpush.msra.mxu0 %v1136
        %1139 = vmatpush.msra.mxu0 %v1135
        %1140 = vmatpush.msra.mxu0 %v1134
        %1141 = vmatpush.msra.mxu0 %v1133
        %1142 = vmatpush.msra.mxu0 %v1132
        %1143 = vmatpush.msra.mxu0 %v1131
        %1144 = vmatpush.msra.mxu0 %v1130
        %1145 = vmatpush.msra.mxu0 %v1129
        %1146 = vmatpush.msra.mxu0 %v1128
        %1147 = vmatpush.msra.mxu0 %v1127
        %1148 = vmatpush.msra.mxu0 %v1126
        %1149 = vmatpush.msra.mxu0 %v1125
        %1150 = vmatpush.msra.mxu0 %v1124
        %1151 = vmatpush.msra.mxu0 %v1123
        %1152 = vmatpush.msra.mxu0 %v1122
        %1153 = vmatmul.f32.gmra.mxu0 %v937
        %v1154 = vpop.f32.mrf.mxu0
        %v1155 = vadd.f32 0.0, %v1154
        %1156 = vdwg.mxu0
        %1157 = vmatpush.msra.mxu0 0.0
        %1158 = vmatpush.msra.mxu0 %v1120
        %1159 = vmatpush.msra.mxu0 %v1119
        %1160 = vmatpush.msra.mxu0 %v1118
        %1161 = vmatpush.msra.mxu0 %v1117
        %1162 = vmatpush.msra.mxu0 %v1116
        %1163 = vmatpush.msra.mxu0 %v1115
        %1164 = vmatpush.msra.mxu0 %v1114
        %1165 = vmatpush.msra.mxu0 %v1113
        %1166 = vmatpush.msra.mxu0 %v1112
        %1167 = vmatpush.msra.mxu0 %v1111
        %1168 = vmatpush.msra.mxu0 %v1110
        %1169 = vmatpush.msra.mxu0 %v1109
        %1170 = vmatpush.msra.mxu0 %v1108
        %1171 = vmatpush.msra.mxu0 %v1107
        %1172 = vmatpush.msra.mxu0 %v1106
        %1173 = vmatmul.f32.gmra.mxu0 %v960
        %v1174 = vpop.f32.mrf.mxu0
        %v1175 = vadd.f32 %v1155, %v1174
        %1176 = vdwg.mxu0
        %s1177 = scalar_lea.vmem %s4, 840
        %v1178 = vld [vmem:[%s1177] sm:$0xff]
        %v1179 = vld [vmem:[%s1177 + $0x8] sm:$0xff]
        %v1180 = vld [vmem:[%s1177 + $0x10] sm:$0xff]
        %v1181 = vld [vmem:[%s1177 + $0x18] sm:$0xff]
        %v1182 = vld [vmem:[%s1177 + $0x20] sm:$0xff]
        %v1183 = vld [vmem:[%s1177 + $0x28] sm:$0xff]
        %v1184 = vld [vmem:[%s1177 + $0x30] sm:$0xff]
        %v1185 = vld [vmem:[%s1177 + $0x38] sm:$0xff]
        %v1186 = vld [vmem:[%s1177 + $0x40] sm:$0xff]
        %v1187 = vld [vmem:[%s1177 + $0x48] sm:$0xff]
        %v1188 = vld [vmem:[%s1177 + $0x50] sm:$0xff]
        %v1189 = vld [vmem:[%s1177 + $0x58] sm:$0xff]
        %v1190 = vld [vmem:[%s1177 + $0x60] sm:$0xff]
        %v1191 = vld [vmem:[%s1177 + $0x68] sm:$0xff]
        %v1192 = vld [vmem:[%s1177 + $0x70] sm:$0xff]
        %1193 = vmatpush.msra.mxu0 0.0
        %1194 = vmatpush.msra.mxu0 %v1192
        %1195 = vmatpush.msra.mxu0 %v1191
        %1196 = vmatpush.msra.mxu0 %v1190
        %1197 = vmatpush.msra.mxu0 %v1189
        %1198 = vmatpush.msra.mxu0 %v1188
        %1199 = vmatpush.msra.mxu0 %v1187
        %1200 = vmatpush.msra.mxu0 %v1186
        %1201 = vmatpush.msra.mxu0 %v1185
        %1202 = vmatpush.msra.mxu0 %v1184
        %1203 = vmatpush.msra.mxu0 %v1183
        %1204 = vmatpush.msra.mxu0 %v1182
        %1205 = vmatpush.msra.mxu0 %v1181
        %1206 = vmatpush.msra.mxu0 %v1180
        %1207 = vmatpush.msra.mxu0 %v1179
        %1208 = vmatpush.msra.mxu0 %v1178
        %1209 = vmatmul.f32.gmra.mxu0 %v1000
        %v1210 = vpop.f32.mrf.mxu0
        %v1211 = vadd.f32 0.0, %v1210
        %1212 = vdwg.mxu0
        %v1213 = vadd.f32 %v1175, %v1211
        %s1214 = scalar_lea.vmem %s4, 960
        %v1215 = vld [vmem:[%s1214] sm:$0xff]
        %v1216 = vld [vmem:[%s1214 + $0x8] sm:$0xff]
        %v1217 = vld [vmem:[%s1214 + $0x10] sm:$0xff]
        %v1218 = vld [vmem:[%s1214 + $0x18] sm:$0xff]
        %v1219 = vld [vmem:[%s1214 + $0x20] sm:$0xff]
        %v1220 = vld [vmem:[%s1214 + $0x28] sm:$0xff]
        %v1221 = vld [vmem:[%s1214 + $0x30] sm:$0xff]
        %v1222 = vld [vmem:[%s1214 + $0x38] sm:$0xff]
        %v1223 = vld [vmem:[%s1214 + $0x40] sm:$0xff]
        %v1224 = vld [vmem:[%s1214 + $0x48] sm:$0xff]
        %v1225 = vld [vmem:[%s1214 + $0x50] sm:$0xff]
        %v1226 = vld [vmem:[%s1214 + $0x58] sm:$0xff]
        %v1227 = vld [vmem:[%s1214 + $0x60] sm:$0xff]
        %v1228 = vld [vmem:[%s1214 + $0x68] sm:$0xff]
        %v1229 = vld [vmem:[%s1214 + $0x70] sm:$0xff]
        %1230 = vmatpush.msra.mxu0 0.0
        %1231 = vmatpush.msra.mxu0 %v1229
        %1232 = vmatpush.msra.mxu0 %v1228
        %1233 = vmatpush.msra.mxu0 %v1227
        %1234 = vmatpush.msra.mxu0 %v1226
        %1235 = vmatpush.msra.mxu0 %v1225
        %1236 = vmatpush.msra.mxu0 %v1224
        %1237 = vmatpush.msra.mxu0 %v1223
        %1238 = vmatpush.msra.mxu0 %v1222
        %1239 = vmatpush.msra.mxu0 %v1221
        %1240 = vmatpush.msra.mxu0 %v1220
        %1241 = vmatpush.msra.mxu0 %v1219
        %1242 = vmatpush.msra.mxu0 %v1218
        %1243 = vmatpush.msra.mxu0 %v1217
        %1244 = vmatpush.msra.mxu0 %v1216
        %1245 = vmatpush.msra.mxu0 %v1215
        %1246 = vmatmul.f32.gmra.mxu0 %v1041
        %v1247 = vpop.f32.mrf.mxu0
        %v1248 = vadd.f32 0.0, %v1247
        %1249 = vdwg.mxu0
        %v1250 = vadd.f32 %v1213, %v1248
        %s1251 = scalar_lea.vmem %s4, 1080
        %v1252 = vld [vmem:[%s1251] sm:$0xff]
        %v1253 = vld [vmem:[%s1251 + $0x8] sm:$0xff]
        %v1254 = vld [vmem:[%s1251 + $0x10] sm:$0xff]
        %v1255 = vld [vmem:[%s1251 + $0x18] sm:$0xff]
        %v1256 = vld [vmem:[%s1251 + $0x20] sm:$0xff]
        %v1257 = vld [vmem:[%s1251 + $0x28] sm:$0xff]
        %v1258 = vld [vmem:[%s1251 + $0x30] sm:$0xff]
        %v1259 = vld [vmem:[%s1251 + $0x38] sm:$0xff]
        %v1260 = vld [vmem:[%s1251 + $0x40] sm:$0xff]
        %v1261 = vld [vmem:[%s1251 + $0x48] sm:$0xff]
        %v1262 = vld [vmem:[%s1251 + $0x50] sm:$0xff]
        %v1263 = vld [vmem:[%s1251 + $0x58] sm:$0xff]
        %v1264 = vld [vmem:[%s1251 + $0x60] sm:$0xff]
        %v1265 = vld [vmem:[%s1251 + $0x68] sm:$0xff]
        %v1266 = vld [vmem:[%s1251 + $0x70] sm:$0xff]
        %1267 = vmatpush.msra.mxu0 0.0
        %1268 = vmatpush.msra.mxu0 %v1266
        %1269 = vmatpush.msra.mxu0 %v1265
        %1270 = vmatpush.msra.mxu0 %v1264
        %1271 = vmatpush.msra.mxu0 %v1263
        %1272 = vmatpush.msra.mxu0 %v1262
        %1273 = vmatpush.msra.mxu0 %v1261
        %1274 = vmatpush.msra.mxu0 %v1260
        %1275 = vmatpush.msra.mxu0 %v1259
        %1276 = vmatpush.msra.mxu0 %v1258
        %1277 = vmatpush.msra.mxu0 %v1257
        %1278 = vmatpush.msra.mxu0 %v1256
        %1279 = vmatpush.msra.mxu0 %v1255
        %1280 = vmatpush.msra.mxu0 %v1254
        %1281 = vmatpush.msra.mxu0 %v1253
        %1282 = vmatpush.msra.mxu0 %v1252
        %1283 = vmatmul.f32.gmra.mxu0 %v1082
        %v1284 = vpop.f32.mrf.mxu0
        %v1285 = vadd.f32 0.0, %v1284
        %1286 = vdwg.mxu0
        %v1287 = vadd.f32 %v1250, %v1285
        %v1288 = vmax.f32 %v1104, %v1287
        %v1289 = vld [vmem:[%s5] sm:$0x1]
        %v1291 = vperm.slane %v1289, 0
        %v1293 = vadd.f32 %v1288, %v1291
        %v1294 = vld [vmem:[%s6] sm:$0x1]
        %vm1295 = vcmask 64512
        %v1297 = vsel %vm1295, %v1294, 0
        %1299 = vmatpush.msra.mxu0 0.0
        %1300 = vmatpush.msra.mxu0 0.0
        %1301 = vmatpush.msra.mxu0 0.0
        %1302 = vmatpush.msra.mxu0 0.0
        %1303 = vmatpush.msra.mxu0 0.0
        %1304 = vmatpush.msra.mxu0 0.0
        %1305 = vmatpush.msra.mxu0 0.0
        %1306 = vmatpush.msra.mxu0 0.0
        %1307 = vmatpush.msra.mxu0 0.0
        %1308 = vmatpush.msra.mxu0 0.0
        %1309 = vmatpush.msra.mxu0 0.0
        %1310 = vmatpush.msra.mxu0 0.0
        %1311 = vmatpush.msra.mxu0 0.0
        %1312 = vmatpush.msra.mxu0 0.0
        %1313 = vmatpush.msra.mxu0 0.0
        %1314 = vmatpush.msra.mxu0 %v1293
        %1315 = vmatmul.f32.gmra.mxu0 %v1297
        %v1316 = vpop.f32.mrf.mxu0
        %v1317 = vadd.f32 0.0, %v1316
        %1318 = vdwg.mxu0
        %v1319 = vld [vmem:[%s7] sm:$0x1]
        %v1321 = vsel %vm1295, %v1319, 0
        %1323 = vmatpush.msra.mxu0 0.0
        %1324 = vmatpush.msra.mxu0 0.0
        %1325 = vmatpush.msra.mxu0 0.0
        %1326 = vmatpush.msra.mxu0 0.0
        %1327 = vmatpush.msra.mxu0 0.0
        %1328 = vmatpush.msra.mxu0 0.0
        %1329 = vmatpush.msra.mxu0 0.0
        %1330 = vmatpush.msra.mxu0 0.0
        %1331 = vmatpush.msra.mxu0 0.0
        %1332 = vmatpush.msra.mxu0 0.0
        %1333 = vmatpush.msra.mxu0 0.0
        %1334 = vmatpush.msra.mxu0 0.0
        %1335 = vmatpush.msra.mxu0 0.0
        %1336 = vmatpush.msra.mxu0 0.0
        %1337 = vmatpush.msra.mxu0 0.0
        %1338 = vmatpush.msra.mxu0 %v1293
        %1339 = vmatmul.f32.gmra.mxu0 %v1321
        %v1340 = vpop.f32.mrf.mxu0
        %v1341 = vadd.f32 0.0, %v1340
        %1342 = vdwg.mxu0
        %v1343 = vmax.f32 %v1317, %v1341
        %v1344 = vmax.f32 %v1343, 0.0
        %v1345 = vld [vmem:[%s8] sm:$0xff]
        %v1346 = vld [vmem:[%s8 + $0x8] sm:$0xff]
        %v1347 = vld [vmem:[%s8 + $0x10] sm:$0xff]
        %v1348 = vld [vmem:[%s8 + $0x18] sm:$0xff]
        %v1349 = vld [vmem:[%s8 + $0x20] sm:$0xff]
        %v1350 = vld [vmem:[%s8 + $0x28] sm:$0xff]
        %v1351 = vld [vmem:[%s8 + $0x30] sm:$0xff]
        %v1352 = vld [vmem:[%s8 + $0x38] sm:$0xff]
        %v1353 = vld [vmem:[%s8 + $0x40] sm:$0xff]
        %v1354 = vld [vmem:[%s8 + $0x48] sm:$0xff]
        %s1355 = scalar_lea.vmem %s6, 1
        %v1356 = vld [vmem:[%s1355] sm:$0x1]
        %v1358 = vsel %vm1295, %v1356, 0
        %1360 = vmatpush.msra.mxu0 0.0
        %1361 = vmatpush.msra.mxu0 0.0
        %1362 = vmatpush.msra.mxu0 0.0
        %1363 = vmatpush.msra.mxu0 0.0
        %1364 = vmatpush.msra.mxu0 0.0
        %1365 = vmatpush.msra.mxu0 0.0
        %1366 = vmatpush.msra.mxu0 0.0
        %1367 = vmatpush.msra.mxu0 0.0
        %1368 = vmatpush.msra.mxu0 0.0
        %1369 = vmatpush.msra.mxu0 0.0
        %1370 = vmatpush.msra.mxu0 0.0
        %1371 = vmatpush.msra.mxu0 0.0
        %1372 = vmatpush.msra.mxu0 0.0
        %1373 = vmatpush.msra.mxu0 0.0
        %1374 = vmatpush.msra.mxu0 0.0
        %1375 = vmatpush.msra.mxu0 %v1293
        %1376 = vmatmul.f32.gmra.mxu0 %v1358
        %v1377 = vpop.f32.mrf.mxu0
        %v1378 = vadd.f32 0.0, %v1377
        %1379 = vdwg.mxu0
        %s1380 = scalar_lea.vmem %s7, 1
        %v1381 = vld [vmem:[%s1380] sm:$0x1]
        %v1383 = vsel %vm1295, %v1381, 0
        %1385 = vmatpush.msra.mxu0 0.0
        %1386 = vmatpush.msra.mxu0 0.0
        %1387 = vmatpush.msra.mxu0 0.0
        %1388 = vmatpush.msra.mxu0 0.0
        %1389 = vmatpush.msra.mxu0 0.0
        %1390 = vmatpush.msra.mxu0 0.0
        %1391 = vmatpush.msra.mxu0 0.0
        %1392 = vmatpush.msra.mxu0 0.0
        %1393 = vmatpush.msra.mxu0 0.0
        %1394 = vmatpush.msra.mxu0 0.0
        %1395 = vmatpush.msra.mxu0 0.0
        %1396 = vmatpush.msra.mxu0 0.0
        %1397 = vmatpush.msra.mxu0 0.0
        %1398 = vmatpush.msra.mxu0 0.0
        %1399 = vmatpush.msra.mxu0 0.0
        %1400 = vmatpush.msra.mxu0 %v1293
        %1401 = vmatmul.f32.gmra.mxu0 %v1383
        %v1402 = vpop.f32.mrf.mxu0
        %v1403 = vadd.f32 0.0, %v1402
        %1404 = vdwg.mxu0
        %v1405 = vmax.f32 %v1378, %v1403
        %v1406 = vmax.f32 %v1405, 0.0
        %s1407 = scalar_lea.vmem %s8, 80
        %v1408 = vld [vmem:[%s1407] sm:$0xff]
        %v1409 = vld [vmem:[%s1407 + $0x8] sm:$0xff]
        %v1410 = vld [vmem:[%s1407 + $0x10] sm:$0xff]
        %v1411 = vld [vmem:[%s1407 + $0x18] sm:$0xff]
        %v1412 = vld [vmem:[%s1407 + $0x20] sm:$0xff]
        %v1413 = vld [vmem:[%s1407 + $0x28] sm:$0xff]
        %v1414 = vld [vmem:[%s1407 + $0x30] sm:$0xff]
        %v1415 = vld [vmem:[%s1407 + $0x38] sm:$0xff]
        %v1416 = vld [vmem:[%s1407 + $0x40] sm:$0xff]
        %v1417 = vld [vmem:[%s1407 + $0x48] sm:$0xff]
        %vm1418 = vcmask 654336
        %v1420 = vsel %vm1418, %v1406, 0
        %1422 = vmatpush.msra.mxu0 0.0
        %1423 = vmatpush.msra.mxu0 0.0
        %1424 = vmatpush.msra.mxu0 0.0
        %1425 = vmatpush.msra.mxu0 0.0
        %1426 = vmatpush.msra.mxu0 0.0
        %1427 = vmatpush.msra.mxu0 0.0
        %1428 = vmatpush.msra.mxu0 %v1417
        %1429 = vmatpush.msra.mxu0 %v1416
        %1430 = vmatpush.msra.mxu0 %v1415
        %1431 = vmatpush.msra.mxu0 %v1414
        %1432 = vmatpush.msra.mxu0 %v1413
        %1433 = vmatpush.msra.mxu0 %v1412
        %1434 = vmatpush.msra.mxu0 %v1411
        %1435 = vmatpush.msra.mxu0 %v1410
        %1436 = vmatpush.msra.mxu0 %v1409
        %1437 = vmatpush.msra.mxu0 %v1408
        %1438 = vmatmul.f32.gmra.mxu0 %v1420
        %v1439 = vpop.f32.mrf.mxu0
        %v1440 = vadd.f32 0.0, %v1439
        %1441 = vdwg.mxu0
        %v1443 = vsel %vm1418, %v1344, 0
        %1445 = vmatpush.msra.mxu0 0.0
        %1446 = vmatpush.msra.mxu0 0.0
        %1447 = vmatpush.msra.mxu0 0.0
        %1448 = vmatpush.msra.mxu0 0.0
        %1449 = vmatpush.msra.mxu0 0.0
        %1450 = vmatpush.msra.mxu0 0.0
        %1451 = vmatpush.msra.mxu0 %v1354
        %1452 = vmatpush.msra.mxu0 %v1353
        %1453 = vmatpush.msra.mxu0 %v1352
        %1454 = vmatpush.msra.mxu0 %v1351
        %1455 = vmatpush.msra.mxu0 %v1350
        %1456 = vmatpush.msra.mxu0 %v1349
        %1457 = vmatpush.msra.mxu0 %v1348
        %1458 = vmatpush.msra.mxu0 %v1347
        %1459 = vmatpush.msra.mxu0 %v1346
        %1460 = vmatpush.msra.mxu0 %v1345
        %1461 = vmatmul.f32.gmra.mxu0 %v1443
        %v1462 = vpop.f32.mrf.mxu0
        %v1463 = vadd.f32 %v1440, %v1462
        %1464 = vdwg.mxu0
        %s1465 = scalar_lea.vmem %s6, 2
        %v1466 = vld [vmem:[%s1465] sm:$0x1]
        %v1468 = vsel %vm1295, %v1466, 0
        %1470 = vmatpush.msra.mxu0 0.0
        %1471 = vmatpush.msra.mxu0 0.0
        %1472 = vmatpush.msra.mxu0 0.0
        %1473 = vmatpush.msra.mxu0 0.0
        %1474 = vmatpush.msra.mxu0 0.0
        %1475 = vmatpush.msra.mxu0 0.0
        %1476 = vmatpush.msra.mxu0 0.0
        %1477 = vmatpush.msra.mxu0 0.0
        %1478 = vmatpush.msra.mxu0 0.0
        %1479 = vmatpush.msra.mxu0 0.0
        %1480 = vmatpush.msra.mxu0 0.0
        %1481 = vmatpush.msra.mxu0 0.0
        %1482 = vmatpush.msra.mxu0 0.0
        %1483 = vmatpush.msra.mxu0 0.0
        %1484 = vmatpush.msra.mxu0 0.0
        %1485 = vmatpush.msra.mxu0 %v1293
        %1486 = vmatmul.f32.gmra.mxu0 %v1468
        %v1487 = vpop.f32.mrf.mxu0
        %v1488 = vadd.f32 0.0, %v1487
        %1489 = vdwg.mxu0
        %s1490 = scalar_lea.vmem %s7, 2
        %v1491 = vld [vmem:[%s1490] sm:$0x1]
        %v1493 = vsel %vm1295, %v1491, 0
        %1495 = vmatpush.msra.mxu0 0.0
        %1496 = vmatpush.msra.mxu0 0.0
        %1497 = vmatpush.msra.mxu0 0.0
        %1498 = vmatpush.msra.mxu0 0.0
        %1499 = vmatpush.msra.mxu0 0.0
        %1500 = vmatpush.msra.mxu0 0.0
        %1501 = vmatpush.msra.mxu0 0.0
        %1502 = vmatpush.msra.mxu0 0.0
        %1503 = vmatpush.msra.mxu0 0.0
        %1504 = vmatpush.msra.mxu0 0.0
        %1505 = vmatpush.msra.mxu0 0.0
        %1506 = vmatpush.msra.mxu0 0.0
        %1507 = vmatpush.msra.mxu0 0.0
        %1508 = vmatpush.msra.mxu0 0.0
        %1509 = vmatpush.msra.mxu0 0.0
        %1510 = vmatpush.msra.mxu0 %v1293
        %1511 = vmatmul.f32.gmra.mxu0 %v1493
        %v1512 = vpop.f32.mrf.mxu0
        %v1513 = vadd.f32 0.0, %v1512
        %1514 = vdwg.mxu0
        %v1515 = vmax.f32 %v1488, %v1513
        %v1516 = vmax.f32 %v1515, 0.0
        %s1517 = scalar_lea.vmem %s8, 160
        %v1518 = vld [vmem:[%s1517] sm:$0xff]
        %v1519 = vld [vmem:[%s1517 + $0x8] sm:$0xff]
        %v1520 = vld [vmem:[%s1517 + $0x10] sm:$0xff]
        %v1521 = vld [vmem:[%s1517 + $0x18] sm:$0xff]
        %v1522 = vld [vmem:[%s1517 + $0x20] sm:$0xff]
        %v1523 = vld [vmem:[%s1517 + $0x28] sm:$0xff]
        %v1524 = vld [vmem:[%s1517 + $0x30] sm:$0xff]
        %v1525 = vld [vmem:[%s1517 + $0x38] sm:$0xff]
        %v1526 = vld [vmem:[%s1517 + $0x40] sm:$0xff]
        %v1527 = vld [vmem:[%s1517 + $0x48] sm:$0xff]
        %v1529 = vsel %vm1418, %v1516, 0
        %1531 = vmatpush.msra.mxu0 0.0
        %1532 = vmatpush.msra.mxu0 0.0
        %1533 = vmatpush.msra.mxu0 0.0
        %1534 = vmatpush.msra.mxu0 0.0
        %1535 = vmatpush.msra.mxu0 0.0
        %1536 = vmatpush.msra.mxu0 0.0
        %1537 = vmatpush.msra.mxu0 %v1527
        %1538 = vmatpush.msra.mxu0 %v1526
        %1539 = vmatpush.msra.mxu0 %v1525
        %1540 = vmatpush.msra.mxu0 %v1524
        %1541 = vmatpush.msra.mxu0 %v1523
        %1542 = vmatpush.msra.mxu0 %v1522
        %1543 = vmatpush.msra.mxu0 %v1521
        %1544 = vmatpush.msra.mxu0 %v1520
        %1545 = vmatpush.msra.mxu0 %v1519
        %1546 = vmatpush.msra.mxu0 %v1518
        %1547 = vmatmul.f32.gmra.mxu0 %v1529
        %v1548 = vpop.f32.mrf.mxu0
        %v1549 = vadd.f32 0.0, %v1548
        %1550 = vdwg.mxu0
        %v1551 = vadd.f32 %v1463, %v1549
        %s1552 = scalar_lea.vmem %s6, 3
        %v1553 = vld [vmem:[%s1552] sm:$0x1]
        %v1555 = vsel %vm1295, %v1553, 0
        %1557 = vmatpush.msra.mxu0 0.0
        %1558 = vmatpush.msra.mxu0 0.0
        %1559 = vmatpush.msra.mxu0 0.0
        %1560 = vmatpush.msra.mxu0 0.0
        %1561 = vmatpush.msra.mxu0 0.0
        %1562 = vmatpush.msra.mxu0 0.0
        %1563 = vmatpush.msra.mxu0 0.0
        %1564 = vmatpush.msra.mxu0 0.0
        %1565 = vmatpush.msra.mxu0 0.0
        %1566 = vmatpush.msra.mxu0 0.0
        %1567 = vmatpush.msra.mxu0 0.0
        %1568 = vmatpush.msra.mxu0 0.0
        %1569 = vmatpush.msra.mxu0 0.0
        %1570 = vmatpush.msra.mxu0 0.0
        %1571 = vmatpush.msra.mxu0 0.0
        %1572 = vmatpush.msra.mxu0 %v1293
        %1573 = vmatmul.f32.gmra.mxu0 %v1555
        %v1574 = vpop.f32.mrf.mxu0
        %v1575 = vadd.f32 0.0, %v1574
        %1576 = vdwg.mxu0
        %s1577 = scalar_lea.vmem %s7, 3
        %v1578 = vld [vmem:[%s1577] sm:$0x1]
        %v1580 = vsel %vm1295, %v1578, 0
        %1582 = vmatpush.msra.mxu0 0.0
        %1583 = vmatpush.msra.mxu0 0.0
        %1584 = vmatpush.msra.mxu0 0.0
        %1585 = vmatpush.msra.mxu0 0.0
        %1586 = vmatpush.msra.mxu0 0.0
        %1587 = vmatpush.msra.mxu0 0.0
        %1588 = vmatpush.msra.mxu0 0.0
        %1589 = vmatpush.msra.mxu0 0.0
        %1590 = vmatpush.msra.mxu0 0.0
        %1591 = vmatpush.msra.mxu0 0.0
        %1592 = vmatpush.msra.mxu0 0.0
        %1593 = vmatpush.msra.mxu0 0.0
        %1594 = vmatpush.msra.mxu0 0.0
        %1595 = vmatpush.msra.mxu0 0.0
        %1596 = vmatpush.msra.mxu0 0.0
        %1597 = vmatpush.msra.mxu0 %v1293
        %1598 = vmatmul.f32.gmra.mxu0 %v1580
        %v1599 = vpop.f32.mrf.mxu0
        %v1600 = vadd.f32 0.0, %v1599
        %1601 = vdwg.mxu0
        %v1602 = vmax.f32 %v1575, %v1600
        %v1603 = vmax.f32 %v1602, 0.0
        %s1604 = scalar_lea.vmem %s8, 240
        %v1605 = vld [vmem:[%s1604] sm:$0xff]
        %v1606 = vld [vmem:[%s1604 + $0x8] sm:$0xff]
        %v1607 = vld [vmem:[%s1604 + $0x10] sm:$0xff]
        %v1608 = vld [vmem:[%s1604 + $0x18] sm:$0xff]
        %v1609 = vld [vmem:[%s1604 + $0x20] sm:$0xff]
        %v1610 = vld [vmem:[%s1604 + $0x28] sm:$0xff]
        %v1611 = vld [vmem:[%s1604 + $0x30] sm:$0xff]
        %v1612 = vld [vmem:[%s1604 + $0x38] sm:$0xff]
        %v1613 = vld [vmem:[%s1604 + $0x40] sm:$0xff]
        %v1614 = vld [vmem:[%s1604 + $0x48] sm:$0xff]
        %v1616 = vsel %vm1418, %v1603, 0
        %1618 = vmatpush.msra.mxu0 0.0
        %1619 = vmatpush.msra.mxu0 0.0
        %1620 = vmatpush.msra.mxu0 0.0
        %1621 = vmatpush.msra.mxu0 0.0
        %1622 = vmatpush.msra.mxu0 0.0
        %1623 = vmatpush.msra.mxu0 0.0
        %1624 = vmatpush.msra.mxu0 %v1614
        %1625 = vmatpush.msra.mxu0 %v1613
        %1626 = vmatpush.msra.mxu0 %v1612
        %1627 = vmatpush.msra.mxu0 %v1611
        %1628 = vmatpush.msra.mxu0 %v1610
        %1629 = vmatpush.msra.mxu0 %v1609
        %1630 = vmatpush.msra.mxu0 %v1608
        %1631 = vmatpush.msra.mxu0 %v1607
        %1632 = vmatpush.msra.mxu0 %v1606
        %1633 = vmatpush.msra.mxu0 %v1605
        %1634 = vmatmul.f32.gmra.mxu0 %v1616
        %v1635 = vpop.f32.mrf.mxu0
        %v1636 = vadd.f32 0.0, %v1635
        %1637 = vdwg.mxu0
        %v1638 = vadd.f32 %v1551, %v1636
        %v1639 = vld [vmem:[%s9] sm:$0x1]
        %v1640 = vadd.f32 %v1638, %v1639
        %v1641 = vmax.f32 %v1640, 0.0
        %v1642 = vld [vmem:[%s10] sm:$0xff]
        %v1643 = vld [vmem:[%s10 + $0x8] sm:$0xff]
        %v1644 = vld [vmem:[%s10 + $0x10] sm:$0xff]
        %v1645 = vld [vmem:[%s10 + $0x18] sm:$0xff]
        %v1646 = vld [vmem:[%s10 + $0x20] sm:$0xff]
        %v1647 = vld [vmem:[%s10 + $0x28] sm:$0xff]
        %v1648 = vld [vmem:[%s10 + $0x30] sm:$0x3]
        %v1649 = vld [vmem:[%s11] sm:$0x1]
        %vm1650 = vcmask 408576
        %v1652 = vsel %vm1650, %v1641, 0
        %vm1654 = vcmask 1041408
        %v1656 = vsel %vm1654, %v1648, 0
        %1658 = vmatpush.msra.mxu0 0.0
        %1659 = vmatpush.msra.mxu0 0.0
        %1660 = vmatpush.msra.mxu0 0.0
        %1661 = vmatpush.msra.mxu0 0.0
        %1662 = vmatpush.msra.mxu0 0.0
        %1663 = vmatpush.msra.mxu0 0.0
        %1664 = vmatpush.msra.mxu0 0.0
        %1665 = vmatpush.msra.mxu0 0.0
        %1666 = vmatpush.msra.mxu0 0.0
        %1667 = vmatpush.msra.mxu0 %v1656
        %1668 = vmatpush.msra.mxu0 %v1647
        %1669 = vmatpush.msra.mxu0 %v1646
        %1670 = vmatpush.msra.mxu0 %v1645
        %1671 = vmatpush.msra.mxu0 %v1644
        %1672 = vmatpush.msra.mxu0 %v1643
        %1673 = vmatpush.msra.mxu0 %v1642
        %1674 = vmatmul.f32.gmra.mxu0 %v1652
        %v1675 = vpop.f32.mrf.mxu0
        %v1676 = vadd.f32 %v1649, %v1675
        %1677 = vdwg.mxu0
        %vm1678 = vcmask 73728
        %v1679 = vsel %vm1678, %v1676, -inf
        %1680 = vmax.xlane.f32.xlu0 %v1679
        %v1681 = vpop.xlane.xlu0 %1680
        %v1682 = vsub.f32 %v1676, %v1681
        %v1683 = vmul.f32 %v1682, 1.442695
        %v1684 = vpow.pop %v1683
        %v1685 = vsel %vm1678, %v1684, 0.0
        %1686 = vadd.xlane.f32.xlu0 %v1685
        %v1687 = vpop.xlane.xlu0 %1686
        %v1688 = vlog2.pop %v1687
        %v1689 = vmul.f32 %v1688, 0.6931472
        %v1690 = vsub.f32 %v1682, %v1689
        %1691 = vst.msk [vmem:[%s405] sm:$0x1] %vm1678, %v1690
        %s1692 = sand.u32 %s291, 1
        %s1693 = scalar_lea.sflag [#allocation4], %s1692
        %s1694 = sand.u32 %s291, 1
        %s1695 = scalar_lea.vmem [#allocation3], %s1694
        // Predicated region
        $region69: #{network_gabor_forward.1} parent=67 // pred_check
          %p1696 = pneg %p301
        $region70: #{network_gabor_forward.1} parent=67 // pred_check_branch
          %1698 = sbr.rel (%p1696) target = $region72
        $region71: #{network_gabor_forward.1} parent=67 // pred_region
          %1700 = vsyncadd %s1693, 0
          %s1701 = scalar_lea.hbm %s12, %s26
          %s1703 = sshll.u32 %s1695, 4
          %s1704 = int_to_ptr.vmem [resolvable:$true] %s1703
          %s1705 = sshll.u32 %s1701, 4
          %s1706 = int_to_ptr.hbm [resolvable:$true] %s1705
          %1708 = dma.vmem_to_hbm [thread:$0]  %s1704, 16, %s1706, %s1693
        $region72: #{network_gabor_forward.1} parent=67 // pred_fallthru
          _
      $region68: #{network_gabor_forward.1} parent=5 // pred_fallthru
        _
      %p1709 = scmp.le.s32.totalorder 2, %s21
      // Predicated region
      $region73: #{network_gabor_forward.1} parent=5 // pred_check
        %p1710 = pneg %p1709
      $region74: #{network_gabor_forward.1} parent=5 // pred_check_branch
        %1712 = sbr.rel (%p1710) target = $region76
      $region75: #{network_gabor_forward.1} parent=5 // pred_region
        %s1713 = ssub.s32 %s21, 2
        // Predicated region
        $region77: #{network_gabor_forward.1} parent=75 // pred_check
          %p1714 = pneg %p307
        $region78: #{network_gabor_forward.1} parent=75 // pred_check_branch
          %1716 = sbr.rel (%p1714) target = $region80
        $region79: #{network_gabor_forward.1} parent=75 // pred_region
          %s1717 = sand.u32 %s292, 1
          %s1718 = scalar_lea.sflag [#allocation4], %s1717
          %s1719 = sand.u32 %s292, 1
          %s1720 = scalar_lea.vmem [#allocation3], %s1719
          %1722 = dma.done %s1718, 16
        $region80: #{network_gabor_forward.1} parent=75 // pred_fallthru
          _
      $region76: #{network_gabor_forward.1} parent=5 // pred_fallthru
        _
    $region6: #{network_gabor_forward.1} parent=1 // loop_footer
      %s25 = sadd.s32 1, %s21
    $region7: #{network_gabor_forward.1} parent=1 // loop_footer_branch
      %20 = sbr.rel target = $region3
    $region8: #{network_gabor_forward.1} parent=1 // loop_exit
      _
    %1723 = vsyncpa [#allocation4], 1
    %s1724 = scalar_lea.sflag [#allocation4], 1
    %1725 = vsyncpa %s1724, 1

</llo_original>
